<compile_context>
chip_gen: v6e
topology: v6e:2x2x1
jax: 0.10.0
libtpu: 0.0.40
codegen_flags: <defaults>
</compile_context>

<pallas_src>
import functools
import math

import jax
import jax.numpy as jnp
from jax.experimental import pallas as pl
from jax.experimental.pallas import tpu as pltpu

VMEM_LIMIT = 32 * 1024 * 1024   # explicit scoped-VMEM budget; safe on v5e/v6e/v7x


def _round_up(x, m):
    return (x + m - 1) // m * m


def _fit_tile(dim, tile):
    """Return (padded_dim, tile).  Full-extent block (no padding) if dim fits one tile."""
    if dim <= tile:
        return dim, dim
    return _round_up(dim, tile), tile


# ------------------------- tiled matmul (linear layers) ----------------------

def _matmul_kernel(x_ref, w_ref, o_ref, acc_ref):
    @pl.when(pl.program_id(2) == 0)
    def _init():
        acc_ref[...] = jnp.zeros_like(acc_ref)

    # bf16 MXU operands, f32 accumulation.
    acc_ref[...] += jnp.dot(x_ref[...].astype(jnp.bfloat16),
                            w_ref[...].astype(jnp.bfloat16),
                            preferred_element_type=jnp.float32)

    @pl.when(pl.program_id(2) == pl.num_programs(2) - 1)
    def _finalize():
        o_ref[...] = acc_ref[...].astype(o_ref.dtype)


def linear(x, w, *, tm=256, tn=256, tk=512):
    """x: (..., K) @ w: (K, N) -> (..., N).  Tiled, double-buffered MXU matmul.

    Dims that fit a single tile use full-extent blocks (no pad/slice copies);
    larger dims are tiled with 128-multiple tiles (fine on v5e's 4x128 MXU and the
    v6e/v7x 2x256 MXU) and zero-padded, which is exact for matmul."""
    lead = x.shape[:-1]
    K = x.shape[-1]
    N = w.shape[1]
    M = math.prod(lead) if lead else 1
    x2 = x.reshape(M, K)

    Mp, tm = _fit_tile(M, tm)
    Kp, tk = _fit_tile(K, tk)
    Np, tn = _fit_tile(N, tn)
    if (Mp, Kp) != (M, K):
        x2 = jnp.pad(x2, ((0, Mp - M), (0, Kp - K)))
    wp = w if (Kp, Np) == (K, N) else jnp.pad(w, ((0, Kp - K), (0, Np - N)))

    out = pl.pallas_call(
        _matmul_kernel,
        out_shape=jax.ShapeDtypeStruct((Mp, Np), x.dtype),
        grid=(Mp // tm, Np // tn, Kp // tk),
        in_specs=[pl.BlockSpec((tm, tk), lambda i, j, k: (i, k)),
                  pl.BlockSpec((tk, tn), lambda i, j, k: (k, j))],
        out_specs=pl.BlockSpec((tm, tn), lambda i, j, k: (i, j)),
        scratch_shapes=[pltpu.VMEM((tm, tn), jnp.float32)],
        compiler_params=pltpu.CompilerParams(
            dimension_semantics=("parallel", "parallel", "arbitrary"),
            vmem_limit_bytes=VMEM_LIMIT),
        cost_estimate=pl.CostEstimate(
            flops=2 * Mp * Np * Kp,
            transcendentals=0,
            bytes_accessed=4 * (Mp * Kp + Kp * Np + Mp * Np)),
    )(x2, wp)
    if (Mp, Np) != (M, N):
        out = out[:M, :N]
    return out.reshape(*lead, N)


# ---------------------- fused RMSNorm + up-projection ------------------------

def _rmsnorm_matmul_kernel(x_ref, g_ref, w_ref, o_ref, xn_ref, *, eps):
    # Normalize the M-block once (j == 0) into VMEM scratch, reuse across N tiles.
    @pl.when(pl.program_id(1) == 0)
    def _norm():
        x = x_ref[...].astype(jnp.float32)
        var = jnp.mean(x * x, axis=-1, keepdims=True)
        xn = x * jax.lax.rsqrt(var + eps) * g_ref[...].astype(jnp.float32)
        xn_ref[...] = xn.astype(xn_ref.dtype)          # bf16 — MXU operand

    o_ref[...] = jnp.dot(xn_ref[...], w_ref[...].astype(jnp.bfloat16),
                         preferred_element_type=jnp.float32).astype(o_ref.dtype)


def rmsnorm_linear(x, g, w, *, eps=1e-6, tm=256, tn=256):
    """y = RMSNorm(x; g) @ w, fused.  K (= LoRA rank) stays whole per block so the
    variance reduction sees the full row; only M and N are tiled/padded."""
    lead = x.shape[:-1]
    K = x.shape[-1]
    N = w.shape[1]
    M = math.prod(lead) if lead else 1
    x2 = x.reshape(M, K)

    Mp, tm = _fit_tile(M, tm)
    Np, tn = _fit_tile(N, tn)
    if Mp != M:
        x2 = jnp.pad(x2, ((0, Mp - M), (0, 0)))
    wp = w if Np == N else jnp.pad(w, ((0, 0), (0, Np - N)))
    g2 = g.reshape(1, K)

    out = pl.pallas_call(
        functools.partial(_rmsnorm_matmul_kernel, eps=eps),
        out_shape=jax.ShapeDtypeStruct((Mp, Np), x.dtype),
        grid=(Mp // tm, Np // tn),
        in_specs=[pl.BlockSpec((tm, K), lambda i, j: (i, 0)),
                  pl.BlockSpec((1, K), lambda i, j: (0, 0)),
                  pl.BlockSpec((K, tn), lambda i, j: (0, j))],
        out_specs=pl.BlockSpec((tm, tn), lambda i, j: (i, j)),
        scratch_shapes=[pltpu.VMEM((tm, K), jnp.bfloat16)],
        compiler_params=pltpu.CompilerParams(
            # N axis must stay 'arbitrary' so each M-block's j loop runs in order
            # (scratch reuse); M axis is megacore-parallel.
            dimension_semantics=("parallel", "arbitrary"),
            vmem_limit_bytes=VMEM_LIMIT),
        cost_estimate=pl.CostEstimate(
            flops=2 * Mp * Np * K + 6 * Mp * K,
            transcendentals=Mp,
            bytes_accessed=4 * (Mp * K + K * Np + Mp * Np)),
    )(x2, g2, wp)
    if (Mp, Np) != (M, N):
        out = out[:M, :N]
    return out.reshape(*lead, N)


# ------------------------------ attention core --------------------------------

def _attn_scores(q, k, scale, kv_start, kv_len, mask):
    """q: (H, tq, Dq), k: (H, tk, Dq) -> masked scaled scores (H, tq, tk) in f32."""
    s = jax.lax.dot_general(q.astype(jnp.bfloat16), k.astype(jnp.bfloat16),
                            (((2,), (2,)), ((0,), (0,))),
                            preferred_element_type=jnp.float32) * scale
    if kv_len is not None:                       # padded sequence -> mask OOB keys
        col = kv_start + jax.lax.broadcasted_iota(jnp.int32, s.shape, 2)
        s = jnp.where(col < kv_len, s, -jnp.inf)
    if mask is not None:                         # keep-mask: 0 -> -inf (torch masked_fill)
        s = jnp.where(mask == 0, -jnp.inf, s)
    return s


def _heads_to_lanes(o):
    """(H, tq, Dv) -> (tq, H*Dv) lane-dense block (heads concatenated along lanes)."""
    return jnp.concatenate([o[h] for h in range(o.shape[0])], axis=-1)


def _flash_step(q_ref, k_ref, v_ref, mask, o_ref, m_ref, l_ref, acc_ref,
                *, scale, kv_len, block_kv):
    ki = pl.program_id(2)

    @pl.when(ki == 0)
    def _init():
        m_ref[...] = jnp.full_like(m_ref, -jnp.inf)
        l_ref[...] = jnp.zeros_like(l_ref)
        acc_ref[...] = jnp.zeros_like(acc_ref)

    s = _attn_scores(q_ref[0], k_ref[0], scale, ki * block_kv, kv_len, mask)

    m_prev = m_ref[...]
    m_new = jnp.maximum(m_prev, jnp.max(s, axis=-1, keepdims=True))
    m_new = jnp.where(m_new == -jnp.inf, 0.0, m_new)          # fully-masked-row guard
    alpha = jnp.exp(m_prev - m_new)
    p = jnp.exp(s - m_new)
    l_ref[...] = alpha * l_ref[...] + jnp.sum(p, axis=-1, keepdims=True)
    acc_ref[...] = alpha * acc_ref[...] + jax.lax.dot_general(
        p.astype(jnp.bfloat16), v_ref[0].astype(jnp.bfloat16),
        (((2,), (1,)), ((0,), (0,))), preferred_element_type=jnp.float32)
    m_ref[...] = m_new

    @pl.when(ki == pl.num_programs(2) - 1)
    def _finalize():
        denom = jnp.where(l_ref[...] == 0.0, 1.0, l_ref[...])   # guard all-masked rows
        out = acc_ref[...] * pl.reciprocal(denom, approx=True)  # divide on the EUP
        o_ref[0] = _heads_to_lanes(out).astype(o_ref.dtype)


def _flash_kernel(q_ref, k_ref, v_ref, o_ref, m_ref, l_ref, acc_ref,
                  *, scale, kv_len, block_kv):
    _flash_step(q_ref, k_ref, v_ref, None, o_ref, m_ref, l_ref, acc_ref,
                scale=scale, kv_len=kv_len, block_kv=block_kv)


def _flash_kernel_masked(q_ref, k_ref, v_ref, mask_ref, o_ref, m_ref, l_ref, acc_ref,
                         *, scale, kv_len, block_kv):
    _flash_step(q_ref, k_ref, v_ref, mask_ref[0], o_ref, m_ref, l_ref, acc_ref,
                scale=scale, kv_len=kv_len, block_kv=block_kv)


def _weights_step(q_ref, k_ref, v_ref, mask, o_ref, w_ref, *, scale, kv_len):
    s = _attn_scores(q_ref[0], k_ref[0], scale, 0, kv_len, mask)
    m = jnp.max(s, axis=-1, keepdims=True)
    m = jnp.where(m == -jnp.inf, 0.0, m)
    p = jnp.exp(s - m)
    denom = jnp.sum(p, axis=-1, keepdims=True)
    denom = jnp.where(denom == 0.0, 1.0, denom)
    p = p * pl.reciprocal(denom, approx=True)
    w_ref[0] = p.astype(w_ref.dtype)
    o = jax.lax.dot_general(p.astype(jnp.bfloat16), v_ref[0].astype(jnp.bfloat16),
                            (((2,), (1,)), ((0,), (0,))),
                            preferred_element_type=jnp.float32)
    o_ref[0] = _heads_to_lanes(o).astype(o_ref.dtype)


def _weights_kernel(q_ref, k_ref, v_ref, o_ref, w_ref, *, scale, kv_len):
    _weights_step(q_ref, k_ref, v_ref, None, o_ref, w_ref, scale=scale, kv_len=kv_len)


def _weights_kernel_masked(q_ref, k_ref, v_ref, mask_ref, o_ref, w_ref, *, scale, kv_len):
    _weights_step(q_ref, k_ref, v_ref, mask_ref[0], o_ref, w_ref, scale=scale, kv_len=kv_len)


def attention_core(q, k, v, scale, mask=None, return_weights=False):
    """q, k: (B,H,S,Dq), v: (B,H,S,Dv); optional keep-mask broadcastable to (B,H,S,S).

    Returns (attn_out, attn_weights):
      * attn_out is (B, S, H*Dv) lane-dense (ready for o_proj, no XLA transpose).
      * return_weights=False -> flash-style kernel over (B, q-tile, kv-tile) with
        online softmax; attn_weights is None (no O(S^2) materialization).
      * return_weights=True  -> q-tiled kernel that also emits (B,H,S,S) weights
        (the O(S^2) output is inherent in that case).
    """
    B, H, S, Dq = q.shape
    Dv = v.shape[-1]
    out_dtype = q.dtype

    if S <= 128:
        Sp, tq, tk = S, S, S                  # full-extent blocks, no padding
    else:
        tq = tk = 128                         # <24 MiB/step even on v7x; 128-multiples for v5e
        Sp = _round_up(S, 128)

    if Sp != S:
        pad = ((0, 0), (0, 0), (0, Sp - S), (0, 0))
        q, k, v = jnp.pad(q, pad), jnp.pad(k, pad), jnp.pad(v, pad)
        kv_len = S                            # in-kernel masking of padded key columns
    else:
        kv_len = None

    mask_arr = None
    Hm = 1
    if mask is not None:
        m = jnp.asarray(mask)
        while m.ndim < 4:
            m = m[None]
        Hm = m.shape[1]                       # 1 (shared) or H (per-head)
        m = jnp.broadcast_to(m, (B, Hm, S, S)).astype(jnp.int8)   # compact keep-mask
        if Sp != S:
            m = jnp.pad(m, ((0, 0), (0, 0), (0, Sp - S), (0, Sp - S)))
        mask_arr = m

    nq, nkv = Sp // tq, Sp // tk

    if not return_weights:
        in_specs = [pl.BlockSpec((1, H, tq, Dq), lambda b, i, j: (b, 0, i, 0)),
                    pl.BlockSpec((1, H, tk, Dq), lambda b, i, j: (b, 0, j, 0)),
                    pl.BlockSpec((1, H, tk, Dv), lambda b, i, j: (b, 0, j, 0))]
        args = [q, k, v]
        if mask_arr is None:
            kern = functools.partial(_flash_kernel, scale=scale, kv_len=kv_len, block_kv=tk)
        else:
            in_specs.append(pl.BlockSpec((1, Hm, tq, tk), lambda b, i, j: (b, 0, i, j)))
            args.append(mask_arr)
            kern = functools.partial(_flash_kernel_masked, scale=scale, kv_len=kv_len,
                                     block_kv=tk)
        out = pl.pallas_call(
            kern,
            grid=(B, nq, nkv),
            out_shape=jax.ShapeDtypeStruct((B, Sp, H * Dv), out_dtype),
            in_specs=in_specs,
            out_specs=pl.BlockSpec((1, tq, H * Dv), lambda b, i, j: (b, i, 0)),
            scratch_shapes=[pltpu.VMEM((H, tq, 1), jnp.float32),
                            pltpu.VMEM((H, tq, 1), jnp.float32),
                            pltpu.VMEM((H, tq, Dv), jnp.float32)],
            compiler_params=pltpu.CompilerParams(
                dimension_semantics=("parallel", "parallel", "arbitrary"),
                vmem_limit_bytes=VMEM_LIMIT),
            cost_estimate=pl.CostEstimate(
                flops=2 * B * H * Sp * Sp * (Dq + Dv),
                transcendentals=B * H * Sp * Sp,
                bytes_accessed=4 * B * H * Sp * (2 * Dq + 2 * Dv)),
        )(*args)
        if Sp != S:
            out = out[:, :S]
        return out, None

    # --- weights path (module semantics: also return softmax probabilities) ---
    in_specs = [pl.BlockSpec((1, H, tq, Dq), lambda b, i: (b, 0, i, 0)),
                pl.BlockSpec((1, H, Sp, Dq), lambda b, i: (b, 0, 0, 0)),
                pl.BlockSpec((1, H, Sp, Dv), lambda b, i: (b, 0, 0, 0))]
    args = [q, k, v]
    if mask_arr is None:
        kern = functools.partial(_weights_kernel, scale=scale, kv_len=kv_len)
    else:
        in_specs.append(pl.BlockSpec((1, Hm, tq, Sp), lambda b, i: (b, 0, i, 0)))
        args.append(mask_arr)
        kern = functools.partial(_weights_kernel_masked, scale=scale, kv_len=kv_len)
    out, wts = pl.pallas_call(
        kern,
        grid=(B, nq),
        out_shape=(jax.ShapeDtypeStruct((B, Sp, H * Dv), out_dtype),
                   jax.ShapeDtypeStruct((B, H, Sp, Sp), out_dtype)),
        in_specs=in_specs,
        out_specs=(pl.BlockSpec((1, tq, H * Dv), lambda b, i: (b, i, 0)),
                   pl.BlockSpec((1, H, tq, Sp), lambda b, i: (b, 0, i, 0))),
        compiler_params=pltpu.CompilerParams(
            dimension_semantics=("parallel", "parallel"),
            vmem_limit_bytes=VMEM_LIMIT),
        cost_estimate=pl.CostEstimate(
            flops=2 * B * H * Sp * Sp * (Dq + Dv),
            transcendentals=B * H * Sp * Sp,
            bytes_accessed=4 * B * H * Sp * (2 * Dq + 2 * Dv + Sp)),
    )(*args)
    if Sp != S:
        out, wts = out[:, :S], wts[:, :, :S, :S]
    return out, wts


# ------------------------------ RoPE (XLA glue) --------------------------------

def _interleave_to_halves(x):
    # torch: view(..., d//2, 2).transpose(-1, -2).reshape(..., d)
    return jnp.concatenate([x[..., 0::2], x[..., 1::2]], axis=-1)


def _rotate_half(x):
    d = x.shape[-1]
    return jnp.concatenate([-x[..., d // 2:], x[..., :d // 2]], axis=-1)


def apply_rotary_pos_emb(q, k, cos, sin, position_ids):
    # q: (b,h,s,d); k: (b,1,s,d); cos/sin: (max_pos, d); position_ids: (b,s)
    cos_e = cos[position_ids][:, None, :, :]
    sin_e = sin[position_ids][:, None, :, :]
    q = _interleave_to_halves(q)
    k = _interleave_to_halves(k)
    q_embed = q * cos_e + _rotate_half(q) * sin_e
    k_embed = k * cos_e + _rotate_half(k) * sin_e
    return q_embed, k_embed


# ------------------------------ MLA module -------------------------------------

CFG = dict(
    hidden_size=64,
    num_heads=4,
    q_lora_rank=32,
    kv_lora_rank=32,
    qk_nope_head_dim=32,
    qk_rope_head_dim=16,
    v_head_dim=32,
    max_position_embeddings=32,
    rope_theta=1000.0,
    attention_dropout=0.0,   # eval mode -> dropout is identity
    attention_bias=False,
)


def init_params(key, cfg):
    hid = cfg["hidden_size"]
    H = cfg["num_heads"]
    dn, dr, dv = cfg["qk_nope_head_dim"], cfg["qk_rope_head_dim"], cfg["v_head_dim"]
    dq = dn + dr
    q_lora, kv_lora = cfg["q_lora_rank"], cfg["kv_lora_rank"]
    std = 0.02
    ks = jax.random.split(key, 5)
    params = {
        "q_down":     jax.random.normal(ks[0], (hid, q_lora), jnp.float32) * std,
        "q_down_ln":  jnp.ones((q_lora,), jnp.float32),
        "q_up":       jax.random.normal(ks[1], (q_lora, H * dq), jnp.float32) * std,
        "kv_down":    jax.random.normal(ks[2], (hid, kv_lora + dr), jnp.float32) * std,
        "kv_down_ln": jnp.ones((kv_lora,), jnp.float32),
        "kv_up":      jax.random.normal(ks[3], (kv_lora, H * (dn + dv)), jnp.float32) * std,
        "o_proj":     jax.random.normal(ks[4], (H * dv, hid), jnp.float32) * std,
    }
    # rotary cos/sin cache (RotaryEmbedding._set_cos_sin_cache)
    inv_freq = 1.0 / (cfg["rope_theta"] ** (jnp.arange(0, dr, 2, dtype=jnp.float32) / dr))
    t = jnp.arange(cfg["max_position_embeddings"], dtype=jnp.float32)
    freqs = jnp.outer(t, inv_freq)
    emb = jnp.concatenate([freqs, freqs], axis=-1)
    params["cos"] = jnp.cos(emb)
    params["sin"] = jnp.sin(emb)
    return params


def mla_forward(params, hidden_states, position_ids, cfg, attention_mask=None,
                return_weights=True):
    b, s, _ = hidden_states.shape
    H = cfg["num_heads"]
    dn, dr, dv = cfg["qk_nope_head_dim"], cfg["qk_rope_head_dim"], cfg["v_head_dim"]
    dq = dn + dr
    kv_lora = cfg["kv_lora_rank"]

    # Q path: down-proj, then RMSNorm fused with the up-proj in one kernel.
    q_c = linear(hidden_states, params["q_down"])
    q = rmsnorm_linear(q_c, params["q_down_ln"], params["q_up"])
    q = q.reshape(b, s, H, dq).transpose(0, 2, 1, 3)           # (b, H, s, dq)
    q_nope, q_pe = q[..., :dn], q[..., dn:]

    # KV path
    ckv = linear(hidden_states, params["kv_down"])
    compressed_kv, k_pe = ckv[..., :kv_lora], ckv[..., kv_lora:]
    k_pe = k_pe.reshape(b, s, 1, dr).transpose(0, 2, 1, 3)     # (b, 1, s, dr)
    kv = rmsnorm_linear(compressed_kv, params["kv_down_ln"], params["kv_up"])
    kv = kv.reshape(b, s, H, dn + dv).transpose(0, 2, 1, 3)    # (b, H, s, dn+dv)
    k_nope, value_states = kv[..., :dn], kv[..., dn:]

    # RoPE — gather directly from the full cos/sin cache (safe for offset position_ids).
    q_pe, k_pe = apply_rotary_pos_emb(q_pe, k_pe, params["cos"], params["sin"], position_ids)

    query_states = jnp.concatenate([q_nope, q_pe], axis=-1)                      # (b,H,s,dq)
    key_states = jnp.concatenate(
        [k_nope, jnp.broadcast_to(k_pe, (b, H, s, dr))], axis=-1)                # (b,H,s,dq)

    # Attention core (Pallas): flash-style (or weights-emitting) kernel, bf16 MXU,
    # EUP reciprocal, output already laid out as (b, s, H*dv) for o_proj.
    scale = 1.0 / math.sqrt(dq)
    attn_output, attn_weights = attention_core(
        query_states, key_states, value_states, scale,
        mask=attention_mask, return_weights=return_weights)

    attn_output = linear(attn_output, params["o_proj"])
    return attn_output, attn_weights


# --------------------------------- main -----------------------------------------

if __name__ == "__main__":
    key = jax.random.PRNGKey(0)
    k_param, k_x = jax.random.split(key)

    B, S = 2, 16
    params = init_params(k_param, CFG)
    hidden_states = jax.random.normal(k_x, (B, S, CFG["hidden_size"]), jnp.float32)
    position_ids = jnp.broadcast_to(jnp.arange(S, dtype=jnp.int32), (B, S))

    fwd_with_weights = jax.jit(functools.partial(mla_forward, cfg=CFG, return_weights=True))
    fwd_flash = jax.jit(functools.partial(mla_forward, cfg=CFG, return_weights=False))

    attn_out, attn_w = fwd_with_weights(params, hidden_states, position_ids)
    attn_out_flash, _ = fwd_flash(params, hidden_states, position_ids)
    jax.block_until_ready((attn_out, attn_w, attn_out_flash))

    assert attn_out.shape == (B, S, CFG["hidden_size"])
    assert attn_w.shape == (B, CFG["num_heads"], S, S)
    assert bool(jnp.all(jnp.isfinite(attn_out)))
    assert bool(jnp.all(jnp.isfinite(attn_w)))
    # softmax rows ~ 1 (approx EUP reciprocal -> loose tolerance)
    assert bool(jnp.allclose(jnp.sum(attn_w, axis=-1), 1.0, atol=1e-2))
    # flash (no-weights) path agrees with the weights-emitting path
    assert bool(jnp.allclose(attn_out, attn_out_flash, atol=1e-2, rtol=1e-2))
    print("KERNEL_OK")
</pallas_src>

<mosaic_0001>
module attributes {stable_mosaic.version = 11 : i64} {
  func.func @_rmsnorm_matmul_kernel(%arg0: i32, %arg1: i32, %arg2: memref<32x32xf32, #tpu.memory_space<vmem>>, %arg3: memref<1x32xf32, #tpu.memory_space<vmem>>, %arg4: memref<32x192xf32, #tpu.memory_space<vmem>>, %arg5: memref<32x192xf32, #tpu.memory_space<vmem>>, %arg6: memref<32x32xbf16, #tpu.memory_space<vmem>>) attributes {dimension_semantics = [#tpu.dimension_semantics<parallel>, #tpu.dimension_semantics<arbitrary>], iteration_bounds = array<i64: 1, 1>, scalar_prefetch = 0 : i64, scratch_operands = 1 : i64, tpu.core_type = #tpu.core_type<tc>, window_params = [{transform_indices = @transform_0, window_bounds = array<i64: 32, 32>}, {pipeline_mode = #tpu.pipeline_mode<synchronous>, transform_indices = @transform_1, window_bounds = array<i64: 1, 32>}, {transform_indices = @transform_2, window_bounds = array<i64: 32, 192>}, {transform_indices = @transform_3, window_bounds = array<i64: 32, 192>}]} {
    %c0_i32 = arith.constant 0 : i32
    %0 = arith.cmpi eq, %arg1, %c0_i32 : i32
    %1 = arith.extui %0 : i1 to i32
    %c0_i32_0 = arith.constant 0 : i32
    %2 = arith.cmpi ne, %1, %c0_i32_0 : i32
    scf.if %2 {
      %c0_6 = arith.constant 0 : index
      %c0_7 = arith.constant 0 : index
      %8 = vector.load %arg2[%c0_6, %c0_7] : memref<32x32xf32, #tpu.memory_space<vmem>>, vector<32x32xf32>
      %9 = arith.mulf %8, %8 : vector<32x32xf32>
      %cst_8 = arith.constant dense<0.000000e+00> : vector<32xf32>
      %10 = vector.multi_reduction <add>, %9, %cst_8 [1] : vector<32x32xf32> to vector<32xf32>
      %11 = vector.shape_cast %10 : vector<32xf32> to vector<32x1xf32>
      %cst_9 = arith.constant 3.200000e+01 : f32
      %12 = vector.broadcast %cst_9 : f32 to vector<32x1xf32>
      %13 = arith.divf %11, %12 : vector<32x1xf32>
      %cst_10 = arith.constant 9.99999997E-7 : f32
      %14 = vector.broadcast %cst_10 : f32 to vector<32x1xf32>
      %15 = arith.addf %13, %14 : vector<32x1xf32>
      %16 = math.rsqrt %15 : vector<32x1xf32>
      %17 = vector.broadcast %16 : vector<32x1xf32> to vector<32x32xf32>
      %18 = arith.mulf %8, %17 : vector<32x32xf32>
      %c0_11 = arith.constant 0 : index
      %c0_12 = arith.constant 0 : index
      %19 = vector.load %arg3[%c0_11, %c0_12] : memref<1x32xf32, #tpu.memory_space<vmem>>, vector<1x32xf32>
      %20 = vector.broadcast %19 : vector<1x32xf32> to vector<32x32xf32>
      %21 = arith.mulf %18, %20 : vector<32x32xf32>
      %22 = arith.truncf %21 : vector<32x32xf32> to vector<32x32xbf16>
      %c0_13 = arith.constant 0 : index
      %c0_14 = arith.constant 0 : index
      %23 = vector.load %arg6[%c0_13, %c0_14] : memref<32x32xbf16, #tpu.memory_space<vmem>>, vector<32x32xbf16>
      tpu.vector_store %arg6[%c0_13, %c0_14], %22 {strides = array<i32>} : memref<32x32xbf16, #tpu.memory_space<vmem>>, vector<32x32xbf16>,
    } else {
    }
    %c0 = arith.constant 0 : index
    %c0_1 = arith.constant 0 : index
    %3 = vector.load %arg6[%c0, %c0_1] : memref<32x32xbf16, #tpu.memory_space<vmem>>, vector<32x32xbf16>
    %c0_2 = arith.constant 0 : index
    %c0_3 = arith.constant 0 : index
    %4 = vector.load %arg4[%c0_2, %c0_3] : memref<32x192xf32, #tpu.memory_space<vmem>>, vector<32x192xf32>
    %5 = arith.truncf %4 : vector<32x192xf32> to vector<32x192xbf16>
    %cst = arith.constant dense<0.000000e+00> : vector<32x192xf32>
    %6 = tpu.matmul %3, %5, %cst {dimension_numbers = #tpu.dot_dimension_numbers<[1], [0], [0], [1], [0, 0, 1, 1], [], []>} : vector<32x32xbf16>, vector<32x192xbf16>, vector<32x192xf32> -> vector<32x192xf32>
    %c0_4 = arith.constant 0 : index
    %c0_5 = arith.constant 0 : index
    %7 = vector.load %arg5[%c0_4, %c0_5] : memref<32x192xf32, #tpu.memory_space<vmem>>, vector<32x192xf32>
    tpu.vector_store %arg5[%c0_4, %c0_5], %6 {strides = array<i32>} : memref<32x192xf32, #tpu.memory_space<vmem>>, vector<32x192xf32>,
    return
  }
  func.func @transform_0(%arg0: i32, %arg1: i32) -> (i32, i32) {
    %c0_i32 = arith.constant 0 : i32
    %c0_i32_0 = arith.constant 0 : i32
    return %arg0, %c0_i32 : i32, i32
  }
  func.func @transform_1(%arg0: i32, %arg1: i32) -> (i32, i32) {
    %c0_i32 = arith.constant 0 : i32
    %c0_i32_0 = arith.constant 0 : i32
    %c0_i32_1 = arith.constant 0 : i32
    return %c0_i32, %c0_i32_0 : i32, i32
  }
  func.func @transform_2(%arg0: i32, %arg1: i32) -> (i32, i32) {
    %c0_i32 = arith.constant 0 : i32
    %c0_i32_0 = arith.constant 0 : i32
    return %c0_i32, %arg1 : i32, i32
  }
  func.func @transform_3(%arg0: i32, %arg1: i32) -> (i32, i32) {
    %c0_i32 = arith.constant 0 : i32
    return %arg0, %arg1 : i32, i32
  }
}

module attributes {stable_mosaic.version = 11 : i64} {
  func.func @_matmul_kernel(%arg0: i32, %arg1: i32, %arg2: i32, %arg3: memref<32x64xf32, #tpu.memory_space<vmem>>, %arg4: memref<64x32xf32, #tpu.memory_space<vmem>>, %arg5: memref<32x32xf32, #tpu.memory_space<vmem>>, %arg6: memref<32x32xf32, #tpu.memory_space<vmem>>) attributes {dimension_semantics = [#tpu.dimension_semantics<parallel>, #tpu.dimension_semantics<parallel>, #tpu.dimension_semantics<arbitrary>], iteration_bounds = array<i64: 1, 1, 1>, scalar_prefetch = 0 : i64, scratch_operands = 1 : i64, tpu.core_type = #tpu.core_type<tc>, window_params = [{transform_indices = @transform_0, window_bounds = array<i64: 32, 64>}, {transform_indices = @transform_1, window_bounds = array<i64: 64, 32>}, {transform_indices = @transform_2, window_bounds = array<i64: 32, 32>}]} {
    %c0_i32 = arith.constant 0 : i32
    %0 = arith.cmpi eq, %arg2, %c0_i32 : i32
    %1 = arith.extui %0 : i1 to i32
    %c0_i32_0 = arith.constant 0 : i32
    %2 = arith.cmpi ne, %1, %c0_i32_0 : i32
    scf.if %2 {
      %cst_10 = arith.constant 0.000000e+00 : f32
      %14 = vector.broadcast %cst_10 : f32 to vector<32x32xf32>
      %c0_11 = arith.constant 0 : index
      %c0_12 = arith.constant 0 : index
      %15 = vector.load %arg6[%c0_11, %c0_12] : memref<32x32xf32, #tpu.memory_space<vmem>>, vector<32x32xf32>
      tpu.vector_store %arg6[%c0_11, %c0_12], %14 {strides = array<i32>} : memref<32x32xf32, #tpu.memory_space<vmem>>, vector<32x32xf32>,
    } else {
    }
    %c0 = arith.constant 0 : index
    %c0_1 = arith.constant 0 : index
    %3 = vector.load %arg6[%c0, %c0_1] : memref<32x32xf32, #tpu.memory_space<vmem>>, vector<32x32xf32>
    %c0_2 = arith.constant 0 : index
    %c0_3 = arith.constant 0 : index
    %4 = vector.load %arg3[%c0_2, %c0_3] : memref<32x64xf32, #tpu.memory_space<vmem>>, vector<32x64xf32>
    %5 = arith.truncf %4 : vector<32x64xf32> to vector<32x64xbf16>
    %c0_4 = arith.constant 0 : index
    %c0_5 = arith.constant 0 : index
    %6 = vector.load %arg4[%c0_4, %c0_5] : memref<64x32xf32, #tpu.memory_space<vmem>>, vector<64x32xf32>
    %7 = arith.truncf %6 : vector<64x32xf32> to vector<64x32xbf16>
    %cst = arith.constant dense<0.000000e+00> : vector<32x32xf32>
    %8 = tpu.matmul %5, %7, %cst {dimension_numbers = #tpu.dot_dimension_numbers<[1], [0], [0], [1], [0, 0, 1, 1], [], []>} : vector<32x64xbf16>, vector<64x32xbf16>, vector<32x32xf32> -> vector<32x32xf32>
    %9 = arith.addf %3, %8 : vector<32x32xf32>
    %c0_6 = arith.constant 0 : index
    %c0_7 = arith.constant 0 : index
    %10 = vector.load %arg6[%c0_6, %c0_7] : memref<32x32xf32, #tpu.memory_space<vmem>>, vector<32x32xf32>
    tpu.vector_store %arg6[%c0_6, %c0_7], %9 {strides = array<i32>} : memref<32x32xf32, #tpu.memory_space<vmem>>, vector<32x32xf32>,
    %c0_i32_8 = arith.constant 0 : i32
    %11 = arith.cmpi eq, %arg2, %c0_i32_8 : i32
    %12 = arith.extui %11 : i1 to i32
    %c0_i32_9 = arith.constant 0 : i32
    %13 = arith.cmpi ne, %12, %c0_i32_9 : i32
    scf.if %13 {
      %c0_10 = arith.constant 0 : index
      %c0_11 = arith.constant 0 : index
      %14 = vector.load %arg6[%c0_10, %c0_11] : memref<32x32xf32, #tpu.memory_space<vmem>>, vector<32x32xf32>
      %c0_12 = arith.constant 0 : index
      %c0_13 = arith.constant 0 : index
      %15 = vector.load %arg5[%c0_12, %c0_13] : memref<32x32xf32, #tpu.memory_space<vmem>>, vector<32x32xf32>
      tpu.vector_store %arg5[%c0_12, %c0_13], %14 {strides = array<i32>} : memref<32x32xf32, #tpu.memory_space<vmem>>, vector<32x32xf32>,
    } else {
    }
    return
  }
  func.func @transform_0(%arg0: i32, %arg1: i32, %arg2: i32) -> (i32, i32) {
    %c0_i32 = arith.constant 0 : i32
    return %arg0, %arg2 : i32, i32
  }
  func.func @transform_1(%arg0: i32, %arg1: i32, %arg2: i32) -> (i32, i32) {
    %c0_i32 = arith.constant 0 : i32
    return %arg2, %arg1 : i32, i32
  }
  func.func @transform_2(%arg0: i32, %arg1: i32, %arg2: i32) -> (i32, i32) {
    %c0_i32 = arith.constant 0 : i32
    return %arg0, %arg1 : i32, i32
  }
}

module attributes {stable_mosaic.version = 11 : i64} {
  func.func @_matmul_kernel(%arg0: i32, %arg1: i32, %arg2: i32, %arg3: memref<32x64xf32, #tpu.memory_space<vmem>>, %arg4: memref<64x48xf32, #tpu.memory_space<vmem>>, %arg5: memref<32x48xf32, #tpu.memory_space<vmem>>, %arg6: memref<32x48xf32, #tpu.memory_space<vmem>>) attributes {dimension_semantics = [#tpu.dimension_semantics<parallel>, #tpu.dimension_semantics<parallel>, #tpu.dimension_semantics<arbitrary>], iteration_bounds = array<i64: 1, 1, 1>, scalar_prefetch = 0 : i64, scratch_operands = 1 : i64, tpu.core_type = #tpu.core_type<tc>, window_params = [{transform_indices = @transform_0, window_bounds = array<i64: 32, 64>}, {transform_indices = @transform_1, window_bounds = array<i64: 64, 48>}, {transform_indices = @transform_2, window_bounds = array<i64: 32, 48>}]} {
    %c0_i32 = arith.constant 0 : i32
    %0 = arith.cmpi eq, %arg2, %c0_i32 : i32
    %1 = arith.extui %0 : i1 to i32
    %c0_i32_0 = arith.constant 0 : i32
    %2 = arith.cmpi ne, %1, %c0_i32_0 : i32
    scf.if %2 {
      %cst_10 = arith.constant 0.000000e+00 : f32
      %14 = vector.broadcast %cst_10 : f32 to vector<32x48xf32>
      %c0_11 = arith.constant 0 : index
      %c0_12 = arith.constant 0 : index
      %15 = vector.load %arg6[%c0_11, %c0_12] : memref<32x48xf32, #tpu.memory_space<vmem>>, vector<32x48xf32>
      tpu.vector_store %arg6[%c0_11, %c0_12], %14 {strides = array<i32>} : memref<32x48xf32, #tpu.memory_space<vmem>>, vector<32x48xf32>,
    } else {
    }
    %c0 = arith.constant 0 : index
    %c0_1 = arith.constant 0 : index
    %3 = vector.load %arg6[%c0, %c0_1] : memref<32x48xf32, #tpu.memory_space<vmem>>, vector<32x48xf32>
    %c0_2 = arith.constant 0 : index
    %c0_3 = arith.constant 0 : index
    %4 = vector.load %arg3[%c0_2, %c0_3] : memref<32x64xf32, #tpu.memory_space<vmem>>, vector<32x64xf32>
    %5 = arith.truncf %4 : vector<32x64xf32> to vector<32x64xbf16>
    %c0_4 = arith.constant 0 : index
    %c0_5 = arith.constant 0 : index
    %6 = vector.load %arg4[%c0_4, %c0_5] : memref<64x48xf32, #tpu.memory_space<vmem>>, vector<64x48xf32>
    %7 = arith.truncf %6 : vector<64x48xf32> to vector<64x48xbf16>
    %cst = arith.constant dense<0.000000e+00> : vector<32x48xf32>
    %8 = tpu.matmul %5, %7, %cst {dimension_numbers = #tpu.dot_dimension_numbers<[1], [0], [0], [1], [0, 0, 1, 1], [], []>} : vector<32x64xbf16>, vector<64x48xbf16>, vector<32x48xf32> -> vector<32x48xf32>
    %9 = arith.addf %3, %8 : vector<32x48xf32>
    %c0_6 = arith.constant 0 : index
    %c0_7 = arith.constant 0 : index
    %10 = vector.load %arg6[%c0_6, %c0_7] : memref<32x48xf32, #tpu.memory_space<vmem>>, vector<32x48xf32>
    tpu.vector_store %arg6[%c0_6, %c0_7], %9 {strides = array<i32>} : memref<32x48xf32, #tpu.memory_space<vmem>>, vector<32x48xf32>,
    %c0_i32_8 = arith.constant 0 : i32
    %11 = arith.cmpi eq, %arg2, %c0_i32_8 : i32
    %12 = arith.extui %11 : i1 to i32
    %c0_i32_9 = arith.constant 0 : i32
    %13 = arith.cmpi ne, %12, %c0_i32_9 : i32
    scf.if %13 {
      %c0_10 = arith.constant 0 : index
      %c0_11 = arith.constant 0 : index
      %14 = vector.load %arg6[%c0_10, %c0_11] : memref<32x48xf32, #tpu.memory_space<vmem>>, vector<32x48xf32>
      %c0_12 = arith.constant 0 : index
      %c0_13 = arith.constant 0 : index
      %15 = vector.load %arg5[%c0_12, %c0_13] : memref<32x48xf32, #tpu.memory_space<vmem>>, vector<32x48xf32>
      tpu.vector_store %arg5[%c0_12, %c0_13], %14 {strides = array<i32>} : memref<32x48xf32, #tpu.memory_space<vmem>>, vector<32x48xf32>,
    } else {
    }
    return
  }
  func.func @transform_0(%arg0: i32, %arg1: i32, %arg2: i32) -> (i32, i32) {
    %c0_i32 = arith.constant 0 : i32
    return %arg0, %arg2 : i32, i32
  }
  func.func @transform_1(%arg0: i32, %arg1: i32, %arg2: i32) -> (i32, i32) {
    %c0_i32 = arith.constant 0 : i32
    return %arg2, %arg1 : i32, i32
  }
  func.func @transform_2(%arg0: i32, %arg1: i32, %arg2: i32) -> (i32, i32) {
    %c0_i32 = arith.constant 0 : i32
    return %arg0, %arg1 : i32, i32
  }
}

module attributes {stable_mosaic.version = 11 : i64} {
  func.func @_rmsnorm_matmul_kernel(%arg0: i32, %arg1: i32, %arg2: memref<32x32xf32, #tpu.memory_space<vmem>>, %arg3: memref<1x32xf32, #tpu.memory_space<vmem>>, %arg4: memref<32x256xf32, #tpu.memory_space<vmem>>, %arg5: memref<32x256xf32, #tpu.memory_space<vmem>>, %arg6: memref<32x32xbf16, #tpu.memory_space<vmem>>) attributes {dimension_semantics = [#tpu.dimension_semantics<parallel>, #tpu.dimension_semantics<arbitrary>], iteration_bounds = array<i64: 1, 1>, scalar_prefetch = 0 : i64, scratch_operands = 1 : i64, tpu.core_type = #tpu.core_type<tc>, window_params = [{transform_indices = @transform_0, window_bounds = array<i64: 32, 32>}, {pipeline_mode = #tpu.pipeline_mode<synchronous>, transform_indices = @transform_1, window_bounds = array<i64: 1, 32>}, {transform_indices = @transform_2, window_bounds = array<i64: 32, 256>}, {transform_indices = @transform_3, window_bounds = array<i64: 32, 256>}]} {
    %c0_i32 = arith.constant 0 : i32
    %0 = arith.cmpi eq, %arg1, %c0_i32 : i32
    %1 = arith.extui %0 : i1 to i32
    %c0_i32_0 = arith.constant 0 : i32
    %2 = arith.cmpi ne, %1, %c0_i32_0 : i32
    scf.if %2 {
      %c0_6 = arith.constant 0 : index
      %c0_7 = arith.constant 0 : index
      %8 = vector.load %arg2[%c0_6, %c0_7] : memref<32x32xf32, #tpu.memory_space<vmem>>, vector<32x32xf32>
      %9 = arith.mulf %8, %8 : vector<32x32xf32>
      %cst_8 = arith.constant dense<0.000000e+00> : vector<32xf32>
      %10 = vector.multi_reduction <add>, %9, %cst_8 [1] : vector<32x32xf32> to vector<32xf32>
      %11 = vector.shape_cast %10 : vector<32xf32> to vector<32x1xf32>
      %cst_9 = arith.constant 3.200000e+01 : f32
      %12 = vector.broadcast %cst_9 : f32 to vector<32x1xf32>
      %13 = arith.divf %11, %12 : vector<32x1xf32>
      %cst_10 = arith.constant 9.99999997E-7 : f32
      %14 = vector.broadcast %cst_10 : f32 to vector<32x1xf32>
      %15 = arith.addf %13, %14 : vector<32x1xf32>
      %16 = math.rsqrt %15 : vector<32x1xf32>
      %17 = vector.broadcast %16 : vector<32x1xf32> to vector<32x32xf32>
      %18 = arith.mulf %8, %17 : vector<32x32xf32>
      %c0_11 = arith.constant 0 : index
      %c0_12 = arith.constant 0 : index
      %19 = vector.load %arg3[%c0_11, %c0_12] : memref<1x32xf32, #tpu.memory_space<vmem>>, vector<1x32xf32>
      %20 = vector.broadcast %19 : vector<1x32xf32> to vector<32x32xf32>
      %21 = arith.mulf %18, %20 : vector<32x32xf32>
      %22 = arith.truncf %21 : vector<32x32xf32> to vector<32x32xbf16>
      %c0_13 = arith.constant 0 : index
      %c0_14 = arith.constant 0 : index
      %23 = vector.load %arg6[%c0_13, %c0_14] : memref<32x32xbf16, #tpu.memory_space<vmem>>, vector<32x32xbf16>
      tpu.vector_store %arg6[%c0_13, %c0_14], %22 {strides = array<i32>} : memref<32x32xbf16, #tpu.memory_space<vmem>>, vector<32x32xbf16>,
    } else {
    }
    %c0 = arith.constant 0 : index
    %c0_1 = arith.constant 0 : index
    %3 = vector.load %arg6[%c0, %c0_1] : memref<32x32xbf16, #tpu.memory_space<vmem>>, vector<32x32xbf16>
    %c0_2 = arith.constant 0 : index
    %c0_3 = arith.constant 0 : index
    %4 = vector.load %arg4[%c0_2, %c0_3] : memref<32x256xf32, #tpu.memory_space<vmem>>, vector<32x256xf32>
    %5 = arith.truncf %4 : vector<32x256xf32> to vector<32x256xbf16>
    %cst = arith.constant dense<0.000000e+00> : vector<32x256xf32>
    %6 = tpu.matmul %3, %5, %cst {dimension_numbers = #tpu.dot_dimension_numbers<[1], [0], [0], [1], [0, 0, 1, 1], [], []>} : vector<32x32xbf16>, vector<32x256xbf16>, vector<32x256xf32> -> vector<32x256xf32>
    %c0_4 = arith.constant 0 : index
    %c0_5 = arith.constant 0 : index
    %7 = vector.load %arg5[%c0_4, %c0_5] : memref<32x256xf32, #tpu.memory_space<vmem>>, vector<32x256xf32>
    tpu.vector_store %arg5[%c0_4, %c0_5], %6 {strides = array<i32>} : memref<32x256xf32, #tpu.memory_space<vmem>>, vector<32x256xf32>,
    return
  }
  func.func @transform_0(%arg0: i32, %arg1: i32) -> (i32, i32) {
    %c0_i32 = arith.constant 0 : i32
    %c0_i32_0 = arith.constant 0 : i32
    return %arg0, %c0_i32 : i32, i32
  }
  func.func @transform_1(%arg0: i32, %arg1: i32) -> (i32, i32) {
    %c0_i32 = arith.constant 0 : i32
    %c0_i32_0 = arith.constant 0 : i32
    %c0_i32_1 = arith.constant 0 : i32
    return %c0_i32, %c0_i32_0 : i32, i32
  }
  func.func @transform_2(%arg0: i32, %arg1: i32) -> (i32, i32) {
    %c0_i32 = arith.constant 0 : i32
    %c0_i32_0 = arith.constant 0 : i32
    return %c0_i32, %arg1 : i32, i32
  }
  func.func @transform_3(%arg0: i32, %arg1: i32) -> (i32, i32) {
    %c0_i32 = arith.constant 0 : i32
    return %arg0, %arg1 : i32, i32
  }
}

module attributes {stable_mosaic.version = 11 : i64} {
  func.func @_weights_kernel(%arg0: i32, %arg1: i32, %arg2: memref<1x4x16x48xf32, #tpu.memory_space<vmem>>, %arg3: memref<1x4x16x48xf32, #tpu.memory_space<vmem>>, %arg4: memref<1x4x16x32xf32, #tpu.memory_space<vmem>>, %arg5: memref<1x16x128xf32, #tpu.memory_space<vmem>>, %arg6: memref<1x4x16x16xf32, #tpu.memory_space<vmem>>) attributes {dimension_semantics = [#tpu.dimension_semantics<parallel>, #tpu.dimension_semantics<parallel>], iteration_bounds = array<i64: 2, 1>, scalar_prefetch = 0 : i64, scratch_operands = 0 : i64, tpu.core_type = #tpu.core_type<tc>, window_params = [{transform_indices = @transform_0, window_bounds = array<i64: 1, 4, 16, 48>}, {transform_indices = @transform_1, window_bounds = array<i64: 1, 4, 16, 48>}, {transform_indices = @transform_2, window_bounds = array<i64: 1, 4, 16, 32>}, {transform_indices = @transform_3, window_bounds = array<i64: 1, 16, 128>}, {transform_indices = @transform_4, window_bounds = array<i64: 1, 4, 16, 16>}]} {
    %c0 = arith.constant 0 : index
    %c0_0 = arith.constant 0 : index
    %c0_1 = arith.constant 0 : index
    %c0_2 = arith.constant 0 : index
    %0 = vector.load %arg2[%c0, %c0_0, %c0_1, %c0_2] : memref<1x4x16x48xf32, #tpu.memory_space<vmem>>, vector<1x4x16x48xf32>
    %1 = vector.shape_cast %0 : vector<1x4x16x48xf32> to vector<4x16x48xf32>
    %c0_3 = arith.constant 0 : index
    %c0_4 = arith.constant 0 : index
    %c0_5 = arith.constant 0 : index
    %c0_6 = arith.constant 0 : index
    %2 = vector.load %arg3[%c0_3, %c0_4, %c0_5, %c0_6] : memref<1x4x16x48xf32, #tpu.memory_space<vmem>>, vector<1x4x16x48xf32>
    %3 = vector.shape_cast %2 : vector<1x4x16x48xf32> to vector<4x16x48xf32>
    %4 = arith.truncf %1 : vector<4x16x48xf32> to vector<4x16x48xbf16>
    %5 = arith.truncf %3 : vector<4x16x48xf32> to vector<4x16x48xbf16>
    %cst = arith.constant dense<0.000000e+00> : vector<4x16x16xf32>
    %6 = tpu.matmul %4, %5, %cst {dimension_numbers = #tpu.dot_dimension_numbers<[2], [2], [1], [1], [0, 0, 0, 1, 1, 1], [0], [0]>} : vector<4x16x48xbf16>, vector<4x16x48xbf16>, vector<4x16x16xf32> -> vector<4x16x16xf32>
    %cst_7 = arith.constant 0.144337565 : f32
    %7 = vector.broadcast %cst_7 : f32 to vector<4x16x16xf32>
    %8 = arith.mulf %6, %7 : vector<4x16x16xf32>
    %cst_8 = arith.constant dense<0xFF800000> : vector<4x16xf32>
    %9 = vector.multi_reduction <maximumf>, %8, %cst_8 [2] : vector<4x16x16xf32> to vector<4x16xf32>
    %10 = vector.shape_cast %9 : vector<4x16xf32> to vector<4x16x1xf32>
    %cst_9 = arith.constant 0xFF800000 : f32
    %11 = vector.broadcast %cst_9 : f32 to vector<4x16x1xf32>
    %12 = arith.cmpf oeq, %10, %11 : vector<4x16x1xf32>
    %cst_10 = arith.constant 0.000000e+00 : f32
    %13 = vector.broadcast %cst_10 : f32 to vector<4x16x1xf32>
    %14 = arith.select %12, %13, %10 : vector<4x16x1xi1>, vector<4x16x1xf32>
    %15 = vector.broadcast %14 : vector<4x16x1xf32> to vector<4x16x16xf32>
    %16 = arith.subf %8, %15 : vector<4x16x16xf32>
    %17 = math.exp %16 : vector<4x16x16xf32>
    %cst_11 = arith.constant dense<0.000000e+00> : vector<4x16xf32>
    %18 = vector.multi_reduction <add>, %17, %cst_11 [2] : vector<4x16x16xf32> to vector<4x16xf32>
    %19 = vector.shape_cast %18 : vector<4x16xf32> to vector<4x16x1xf32>
    %cst_12 = arith.constant 0.000000e+00 : f32
    %20 = vector.broadcast %cst_12 : f32 to vector<4x16x1xf32>
    %21 = arith.cmpf oeq, %19, %20 : vector<4x16x1xf32>
    %cst_13 = arith.constant 1.000000e+00 : f32
    %22 = vector.broadcast %cst_13 : f32 to vector<4x16x1xf32>
    %23 = arith.select %21, %22, %19 : vector<4x16x1xi1>, vector<4x16x1xf32>
    %24 = tpu.reciprocal %23 {approx = true} : vector<4x16x1xf32> -> vector<4x16x1xf32>
    %25 = vector.broadcast %24 : vector<4x16x1xf32> to vector<4x16x16xf32>
    %26 = arith.mulf %17, %25 : vector<4x16x16xf32>
    %c0_14 = arith.constant 0 : index
    %c0_15 = arith.constant 0 : index
    %c0_16 = arith.constant 0 : index
    %c0_17 = arith.constant 0 : index
    %27 = vector.load %arg6[%c0_14, %c0_15, %c0_16, %c0_17] : memref<1x4x16x16xf32, #tpu.memory_space<vmem>>, vector<1x4x16x16xf32>
    %28 = vector.shape_cast %27 : vector<1x4x16x16xf32> to vector<4x16x16xf32>
    %29 = vector.shape_cast %26 : vector<4x16x16xf32> to vector<1x4x16x16xf32>
    tpu.vector_store %arg6[%c0_14, %c0_15, %c0_16, %c0_17], %29 {strides = array<i32>} : memref<1x4x16x16xf32, #tpu.memory_space<vmem>>, vector<1x4x16x16xf32>,
    %30 = arith.truncf %26 : vector<4x16x16xf32> to vector<4x16x16xbf16>
    %c0_18 = arith.constant 0 : index
    %c0_19 = arith.constant 0 : index
    %c0_20 = arith.constant 0 : index
    %c0_21 = arith.constant 0 : index
    %31 = vector.load %arg4[%c0_18, %c0_19, %c0_20, %c0_21] : memref<1x4x16x32xf32, #tpu.memory_space<vmem>>, vector<1x4x16x32xf32>
    %32 = vector.shape_cast %31 : vector<1x4x16x32xf32> to vector<4x16x32xf32>
    %33 = arith.truncf %32 : vector<4x16x32xf32> to vector<4x16x32xbf16>
    %cst_22 = arith.constant dense<0.000000e+00> : vector<4x16x32xf32>
    %34 = tpu.matmul %30, %33, %cst_22 {dimension_numbers = #tpu.dot_dimension_numbers<[2], [1], [1], [2], [0, 0, 0, 1, 1, 2], [0], [0]>} : vector<4x16x16xbf16>, vector<4x16x32xbf16>, vector<4x16x32xf32> -> vector<4x16x32xf32>
    %35 = vector.extract_strided_slice %34 {offsets = [0, 0, 0], sizes = [1, 16, 32], strides = [1, 1, 1]} : vector<4x16x32xf32> to vector<1x16x32xf32>
    %36 = vector.shape_cast %35 : vector<1x16x32xf32> to vector<16x32xf32>
    %37 = vector.extract_strided_slice %34 {offsets = [1, 0, 0], sizes = [1, 16, 32], strides = [1, 1, 1]} : vector<4x16x32xf32> to vector<1x16x32xf32>
    %38 = vector.shape_cast %37 : vector<1x16x32xf32> to vector<16x32xf32>
    %39 = vector.extract_strided_slice %34 {offsets = [2, 0, 0], sizes = [1, 16, 32], strides = [1, 1, 1]} : vector<4x16x32xf32> to vector<1x16x32xf32>
    %40 = vector.shape_cast %39 : vector<1x16x32xf32> to vector<16x32xf32>
    %41 = vector.extract_strided_slice %34 {offsets = [3, 0, 0], sizes = [1, 16, 32], strides = [1, 1, 1]} : vector<4x16x32xf32> to vector<1x16x32xf32>
    %42 = vector.shape_cast %41 : vector<1x16x32xf32> to vector<16x32xf32>
    %43 = tpu.concatenate %36, %38, %40, %42 in 1 : vector<16x32xf32>, vector<16x32xf32>, vector<16x32xf32>, vector<16x32xf32> -> vector<16x128xf32>
    %c0_23 = arith.constant 0 : index
    %c0_24 = arith.constant 0 : index
    %c0_25 = arith.constant 0 : index
    %44 = vector.load %arg5[%c0_23, %c0_24, %c0_25] : memref<1x16x128xf32, #tpu.memory_space<vmem>>, vector<1x16x128xf32>
    %45 = vector.shape_cast %44 : vector<1x16x128xf32> to vector<16x128xf32>
    %46 = vector.shape_cast %43 : vector<16x128xf32> to vector<1x16x128xf32>
    tpu.vector_store %arg5[%c0_23, %c0_24, %c0_25], %46 {strides = array<i32>} : memref<1x16x128xf32, #tpu.memory_space<vmem>>, vector<1x16x128xf32>,
    return
  }
  func.func @transform_0(%arg0: i32, %arg1: i32) -> (i32, i32, i32, i32) {
    %c0_i32 = arith.constant 0 : i32
    %c0_i32_0 = arith.constant 0 : i32
    %c0_i32_1 = arith.constant 0 : i32
    return %arg0, %c0_i32, %arg1, %c0_i32_0 : i32, i32, i32, i32
  }
  func.func @transform_1(%arg0: i32, %arg1: i32) -> (i32, i32, i32, i32) {
    %c0_i32 = arith.constant 0 : i32
    %c0_i32_0 = arith.constant 0 : i32
    %c0_i32_1 = arith.constant 0 : i32
    %c0_i32_2 = arith.constant 0 : i32
    return %arg0, %c0_i32, %c0_i32_0, %c0_i32_1 : i32, i32, i32, i32
  }
  func.func @transform_2(%arg0: i32, %arg1: i32) -> (i32, i32, i32, i32) {
    %c0_i32 = arith.constant 0 : i32
    %c0_i32_0 = arith.constant 0 : i32
    %c0_i32_1 = arith.constant 0 : i32
    %c0_i32_2 = arith.constant 0 : i32
    return %arg0, %c0_i32, %c0_i32_0, %c0_i32_1 : i32, i32, i32, i32
  }
  func.func @transform_3(%arg0: i32, %arg1: i32) -> (i32, i32, i32) {
    %c0_i32 = arith.constant 0 : i32
    %c0_i32_0 = arith.constant 0 : i32
    return %arg0, %arg1, %c0_i32 : i32, i32, i32
  }
  func.func @transform_4(%arg0: i32, %arg1: i32) -> (i32, i32, i32, i32) {
    %c0_i32 = arith.constant 0 : i32
    %c0_i32_0 = arith.constant 0 : i32
    %c0_i32_1 = arith.constant 0 : i32
    return %arg0, %c0_i32, %arg1, %c0_i32_0 : i32, i32, i32, i32
  }
}

module attributes {stable_mosaic.version = 11 : i64} {
  func.func @_matmul_kernel(%arg0: i32, %arg1: i32, %arg2: i32, %arg3: memref<32x128xf32, #tpu.memory_space<vmem>>, %arg4: memref<128x64xf32, #tpu.memory_space<vmem>>, %arg5: memref<32x64xf32, #tpu.memory_space<vmem>>, %arg6: memref<32x64xf32, #tpu.memory_space<vmem>>) attributes {dimension_semantics = [#tpu.dimension_semantics<parallel>, #tpu.dimension_semantics<parallel>, #tpu.dimension_semantics<arbitrary>], iteration_bounds = array<i64: 1, 1, 1>, scalar_prefetch = 0 : i64, scratch_operands = 1 : i64, tpu.core_type = #tpu.core_type<tc>, window_params = [{transform_indices = @transform_0, window_bounds = array<i64: 32, 128>}, {transform_indices = @transform_1, window_bounds = array<i64: 128, 64>}, {transform_indices = @transform_2, window_bounds = array<i64: 32, 64>}]} {
    %c0_i32 = arith.constant 0 : i32
    %0 = arith.cmpi eq, %arg2, %c0_i32 : i32
    %1 = arith.extui %0 : i1 to i32
    %c0_i32_0 = arith.constant 0 : i32
    %2 = arith.cmpi ne, %1, %c0_i32_0 : i32
    scf.if %2 {
      %cst_10 = arith.constant 0.000000e+00 : f32
      %14 = vector.broadcast %cst_10 : f32 to vector<32x64xf32>
      %c0_11 = arith.constant 0 : index
      %c0_12 = arith.constant 0 : index
      %15 = vector.load %arg6[%c0_11, %c0_12] : memref<32x64xf32, #tpu.memory_space<vmem>>, vector<32x64xf32>
      tpu.vector_store %arg6[%c0_11, %c0_12], %14 {strides = array<i32>} : memref<32x64xf32, #tpu.memory_space<vmem>>, vector<32x64xf32>,
    } else {
    }
    %c0 = arith.constant 0 : index
    %c0_1 = arith.constant 0 : index
    %3 = vector.load %arg6[%c0, %c0_1] : memref<32x64xf32, #tpu.memory_space<vmem>>, vector<32x64xf32>
    %c0_2 = arith.constant 0 : index
    %c0_3 = arith.constant 0 : index
    %4 = vector.load %arg3[%c0_2, %c0_3] : memref<32x128xf32, #tpu.memory_space<vmem>>, vector<32x128xf32>
    %5 = arith.truncf %4 : vector<32x128xf32> to vector<32x128xbf16>
    %c0_4 = arith.constant 0 : index
    %c0_5 = arith.constant 0 : index
    %6 = vector.load %arg4[%c0_4, %c0_5] : memref<128x64xf32, #tpu.memory_space<vmem>>, vector<128x64xf32>
    %7 = arith.truncf %6 : vector<128x64xf32> to vector<128x64xbf16>
    %cst = arith.constant dense<0.000000e+00> : vector<32x64xf32>
    %8 = tpu.matmul %5, %7, %cst {dimension_numbers = #tpu.dot_dimension_numbers<[1], [0], [0], [1], [0, 0, 1, 1], [], []>} : vector<32x128xbf16>, vector<128x64xbf16>, vector<32x64xf32> -> vector<32x64xf32>
    %9 = arith.addf %3, %8 : vector<32x64xf32>
    %c0_6 = arith.constant 0 : index
    %c0_7 = arith.constant 0 : index
    %10 = vector.load %arg6[%c0_6, %c0_7] : memref<32x64xf32, #tpu.memory_space<vmem>>, vector<32x64xf32>
    tpu.vector_store %arg6[%c0_6, %c0_7], %9 {strides = array<i32>} : memref<32x64xf32, #tpu.memory_space<vmem>>, vector<32x64xf32>,
    %c0_i32_8 = arith.constant 0 : i32
    %11 = arith.cmpi eq, %arg2, %c0_i32_8 : i32
    %12 = arith.extui %11 : i1 to i32
    %c0_i32_9 = arith.constant 0 : i32
    %13 = arith.cmpi ne, %12, %c0_i32_9 : i32
    scf.if %13 {
      %c0_10 = arith.constant 0 : index
      %c0_11 = arith.constant 0 : index
      %14 = vector.load %arg6[%c0_10, %c0_11] : memref<32x64xf32, #tpu.memory_space<vmem>>, vector<32x64xf32>
      %c0_12 = arith.constant 0 : index
      %c0_13 = arith.constant 0 : index
      %15 = vector.load %arg5[%c0_12, %c0_13] : memref<32x64xf32, #tpu.memory_space<vmem>>, vector<32x64xf32>
      tpu.vector_store %arg5[%c0_12, %c0_13], %14 {strides = array<i32>} : memref<32x64xf32, #tpu.memory_space<vmem>>, vector<32x64xf32>,
    } else {
    }
    return
  }
  func.func @transform_0(%arg0: i32, %arg1: i32, %arg2: i32) -> (i32, i32) {
    %c0_i32 = arith.constant 0 : i32
    return %arg0, %arg2 : i32, i32
  }
  func.func @transform_1(%arg0: i32, %arg1: i32, %arg2: i32) -> (i32, i32) {
    %c0_i32 = arith.constant 0 : i32
    return %arg2, %arg1 : i32, i32
  }
  func.func @transform_2(%arg0: i32, %arg1: i32, %arg2: i32) -> (i32, i32) {
    %c0_i32 = arith.constant 0 : i32
    return %arg0, %arg1 : i32, i32
  }
}

</mosaic_0001>

<llo_original>
// kernel: neg.2
$region0: #{neg.2}
  #allocation0 [shape = 's32[1]{0}', space=sflag, size = 0x4, scoped, tag = 'scoped memory for neg.2']
  %s0 = inlined_call_operand.vmem [shape: f32[2,4,16,8], index: 0, kind: input, shape index: {}]
  %s1 = inlined_call_operand.vmem [shape: f32[2,4,16,8], index: 1, kind: output, shape index: {}]
  %v2 = vld [vmem:[%s0] sm:$0xff]
  %3 = xla_tuple %v2
  %4 = xla_tuple %3
  %v5 = vxor.u32 %v2, 2147483648
  %6 = xla_tuple %v5
  %7 = vst [vmem:[%s1] sm:$0xff] %v5
  %s8 = scalar_lea.vmem %s0, 64
  %v9 = vld [vmem:[%s8] sm:$0xff]
  %10 = xla_tuple %v9
  %11 = xla_tuple %10
  %v12 = vxor.u32 %v9, 2147483648
  %13 = xla_tuple %v12
  %s14 = scalar_lea.vmem %s1, 64
  %15 = vst [vmem:[%s14] sm:$0xff] %v12
  %s16 = scalar_lea.vmem %s0, 16
  %v17 = vld [vmem:[%s16] sm:$0xff]
  %18 = xla_tuple %v17
  %19 = xla_tuple %18
  %v20 = vxor.u32 %v17, 2147483648
  %21 = xla_tuple %v20
  %s22 = scalar_lea.vmem %s1, 16
  %23 = vst [vmem:[%s22] sm:$0xff] %v20
  %s24 = scalar_lea.vmem %s0, 80
  %v25 = vld [vmem:[%s24] sm:$0xff]
  %26 = xla_tuple %v25
  %27 = xla_tuple %26
  %v28 = vxor.u32 %v25, 2147483648
  %29 = xla_tuple %v28
  %s30 = scalar_lea.vmem %s1, 80
  %31 = vst [vmem:[%s30] sm:$0xff] %v28
  %s32 = scalar_lea.vmem %s0, 32
  %v33 = vld [vmem:[%s32] sm:$0xff]
  %34 = xla_tuple %v33
  %35 = xla_tuple %34
  %v36 = vxor.u32 %v33, 2147483648
  %37 = xla_tuple %v36
  %s38 = scalar_lea.vmem %s1, 32
  %39 = vst [vmem:[%s38] sm:$0xff] %v36
  %s40 = scalar_lea.vmem %s0, 96
  %v41 = vld [vmem:[%s40] sm:$0xff]
  %42 = xla_tuple %v41
  %43 = xla_tuple %42
  %v44 = vxor.u32 %v41, 2147483648
  %45 = xla_tuple %v44
  %s46 = scalar_lea.vmem %s1, 96
  %47 = vst [vmem:[%s46] sm:$0xff] %v44
  %s48 = scalar_lea.vmem %s0, 48
  %v49 = vld [vmem:[%s48] sm:$0xff]
  %50 = xla_tuple %v49
  %51 = xla_tuple %50
  %v52 = vxor.u32 %v49, 2147483648
  %53 = xla_tuple %v52
  %s54 = scalar_lea.vmem %s1, 48
  %55 = vst [vmem:[%s54] sm:$0xff] %v52
  %s56 = scalar_lea.vmem %s0, 112
  %v57 = vld [vmem:[%s56] sm:$0xff]
  %58 = xla_tuple %v57
  %59 = xla_tuple %58
  %v60 = vxor.u32 %v57, 2147483648
  %61 = xla_tuple %v60
  %s62 = scalar_lea.vmem %s1, 112
  %63 = vst [vmem:[%s62] sm:$0xff] %v60
  %s64 = scalar_lea.vmem %s0, 8
  %v65 = vld [vmem:[%s64] sm:$0xff]
  %66 = xla_tuple %v65
  %67 = xla_tuple %66
  %v68 = vxor.u32 %v65, 2147483648
  %69 = xla_tuple %v68
  %s70 = scalar_lea.vmem %s1, 8
  %71 = vst [vmem:[%s70] sm:$0xff] %v68
  %s72 = scalar_lea.vmem %s0, 72
  %v73 = vld [vmem:[%s72] sm:$0xff]
  %74 = xla_tuple %v73
  %75 = xla_tuple %74
  %v76 = vxor.u32 %v73, 2147483648
  %77 = xla_tuple %v76
  %s78 = scalar_lea.vmem %s1, 72
  %79 = vst [vmem:[%s78] sm:$0xff] %v76
  %s80 = scalar_lea.vmem %s0, 24
  %v81 = vld [vmem:[%s80] sm:$0xff]
  %82 = xla_tuple %v81
  %83 = xla_tuple %82
  %v84 = vxor.u32 %v81, 2147483648
  %85 = xla_tuple %v84
  %s86 = scalar_lea.vmem %s1, 24
  %87 = vst [vmem:[%s86] sm:$0xff] %v84
  %s88 = scalar_lea.vmem %s0, 88
  %v89 = vld [vmem:[%s88] sm:$0xff]
  %90 = xla_tuple %v89
  %91 = xla_tuple %90
  %v92 = vxor.u32 %v89, 2147483648
  %93 = xla_tuple %v92
  %s94 = scalar_lea.vmem %s1, 88
  %95 = vst [vmem:[%s94] sm:$0xff] %v92
  %s96 = scalar_lea.vmem %s0, 40
  %v97 = vld [vmem:[%s96] sm:$0xff]
  %98 = xla_tuple %v97
  %99 = xla_tuple %98
  %v100 = vxor.u32 %v97, 2147483648
  %101 = xla_tuple %v100
  %s102 = scalar_lea.vmem %s1, 40
  %103 = vst [vmem:[%s102] sm:$0xff] %v100
  %s104 = scalar_lea.vmem %s0, 104
  %v105 = vld [vmem:[%s104] sm:$0xff]
  %106 = xla_tuple %v105
  %107 = xla_tuple %106
  %v108 = vxor.u32 %v105, 2147483648
  %109 = xla_tuple %v108
  %s110 = scalar_lea.vmem %s1, 104
  %111 = vst [vmem:[%s110] sm:$0xff] %v108
  %s112 = scalar_lea.vmem %s0, 56
  %v113 = vld [vmem:[%s112] sm:$0xff]
  %114 = xla_tuple %v113
  %115 = xla_tuple %114
  %v116 = vxor.u32 %v113, 2147483648
  %117 = xla_tuple %v116
  %s118 = scalar_lea.vmem %s1, 56
  %119 = vst [vmem:[%s118] sm:$0xff] %v116
  %s120 = scalar_lea.vmem %s0, 120
  %v121 = vld [vmem:[%s120] sm:$0xff]
  %122 = xla_tuple %v121
  %123 = xla_tuple %122
  %v124 = vxor.u32 %v121, 2147483648
  %125 = xla_tuple %v124
  %s126 = scalar_lea.vmem %s1, 120
  %127 = vst [vmem:[%s126] sm:$0xff] %v124

// kernel: mla_forward.6
$region0: #{mla_forward.6}
  #allocation0 [shape = 'u32[]', space=smem, size = 0x4, offset = 0x4, fixed_abs, tag = 'smem constant byte address 0x4 - core index']
  #allocation1 [shape = 'u32[144,128]{1,0:T(1,128)}', space=vmem, size = 0x12000, scoped, tag = 'internal scratch']
  #allocation2 [shape = 'f32[32,32]{1,0:T(8,128)}', space=vmem, size = 0x4000, scoped, tag = 'scratch operand']
  %s0 = inlined_call_operand.vmem [shape: f32[32,64], index: 0, kind: input, shape index: {}]
  %s1 = inlined_call_operand.vmem [shape: f32[64,32], index: 1, kind: input, shape index: {}]
  %s2 = inlined_call_operand.vmem [shape: f32[32,32], index: 2, kind: output, shape index: {}]
  %s3 = sld [smem:[#allocation0]]
  $region26: #{mla_forward.6} parent=0
    _
  %s5 = ssub.s32 1, %s3
  %s6 = scalar_select 0, %s5, %s3
  // Predicated region
  $region2: #{mla_forward.6} parent=0 // pred_check
    _
  $region3: #{mla_forward.6} parent=0 // pred_check_branch
    %8 = sbr.rel (0) target = $region5
  $region4: #{mla_forward.6} parent=0 // pred_region
    _
  $region5: #{mla_forward.6} parent=0 // pred_fallthru
    _
  // Predicated region
  $region6: #{mla_forward.6} parent=0 // pred_check
    _
  $region7: #{mla_forward.6} parent=0 // pred_check_branch
    %10 = sbr.rel (0) target = $region9
  $region8: #{mla_forward.6} parent=0 // pred_region
    _
  $region9: #{mla_forward.6} parent=0 // pred_fallthru
    _
  %p12 = scmp.eq.s32.totalorder 0, 0
  // Predicated region
  $region10: #{mla_forward.6} parent=0 // pred_check
    %p13 = pneg %p12
  $region11: #{mla_forward.6} parent=0 // pred_check_branch
    %15 = sbr.rel (%p13) target = $region13
  $region12: #{mla_forward.6} parent=0 // pred_region
    %vm16 = vcmask 261120
    %17 = vst.msk [vmem:[#allocation2] sm:$0xff] %vm16, 0.0
    %18 = vst.msk [vmem:[#allocation2 + $0x8] sm:$0xff] %vm16, 0.0
    %19 = vst.msk [vmem:[#allocation2 + $0x10] sm:$0xff] %vm16, 0.0
    %20 = vst.msk [vmem:[#allocation2 + $0x18] sm:$0xff] %vm16, 0.0
  $region13: #{mla_forward.6} parent=0 // pred_fallthru
    _
  %v21 = vld [vmem:[#allocation2] sm:$0xff]
  %v22 = vld [vmem:[#allocation2 + $0x8] sm:$0xff]
  %v23 = vld [vmem:[#allocation2 + $0x10] sm:$0xff]
  %v24 = vld [vmem:[#allocation2 + $0x18] sm:$0xff]
  %v25 = vld [vmem:[%s0] sm:$0xff]
  %v26 = vld [vmem:[%s0 + $0x8] sm:$0xff]
  %v27 = vld [vmem:[%s0 + $0x10] sm:$0xff]
  %v28 = vld [vmem:[%s0 + $0x18] sm:$0xff]
  %v29 = vpack.c.bf16 %v26, %v25
  %v30 = vpack.c.bf16 %v28, %v27
  %v31 = vld [vmem:[%s1] sm:$0xff]
  %v32 = vld [vmem:[%s1 + $0x8] sm:$0xff]
  %v33 = vld [vmem:[%s1 + $0x10] sm:$0xff]
  %v34 = vld [vmem:[%s1 + $0x18] sm:$0xff]
  %v35 = vld [vmem:[%s1 + $0x20] sm:$0xff]
  %v36 = vld [vmem:[%s1 + $0x28] sm:$0xff]
  %v37 = vld [vmem:[%s1 + $0x30] sm:$0xff]
  %v38 = vld [vmem:[%s1 + $0x38] sm:$0xff]
  %v39 = vpack.c.bf16 %v32, %v31
  %v40 = vpack.c.bf16 %v34, %v33
  %v41 = vpack.c.bf16 %v36, %v35
  %v42 = vpack.c.bf16 %v38, %v37
  %vm43 = vcmask 523264
  %v45 = vsel %vm43, %v29, 0
  %v48 = vsel %vm43, %v30, 0
  %50 = vmatprep.subr.bf16.mxu0 0
  %51 = vmatpush1.bf16.msra.mxu0 0
  %52 = vmatprep.subr.bf16.mxu0 0
  %53 = vmatpush1.bf16.msra.mxu0 0
  %54 = vmatprep.subr.bf16.mxu0 0
  %55 = vmatpush1.bf16.msra.mxu0 0
  %56 = vmatprep.subr.bf16.mxu0 0
  %57 = vmatpush1.bf16.msra.mxu0 0
  %58 = vmatprep.subr.bf16.mxu0 0
  %59 = vmatpush1.bf16.msra.mxu0 %v42
  %60 = vmatprep.subr.bf16.mxu0 0
  %61 = vmatpush1.bf16.msra.mxu0 %v41
  %62 = vmatprep.subr.bf16.mxu0 0
  %63 = vmatpush1.bf16.msra.mxu0 %v40
  %64 = vmatprep.subr.bf16.mxu0 0
  %65 = vmatpush1.bf16.msra.mxu0 %v39
  %66 = vmatprep.subr.bf16.mxu0 0
  %67 = vmatpush2.bf16.msra.mxu0 0
  %68 = vmatprep.subr.bf16.mxu0 0
  %69 = vmatpush2.bf16.msra.mxu0 0
  %70 = vmatprep.subr.bf16.mxu0 0
  %71 = vmatpush2.bf16.msra.mxu0 0
  %72 = vmatprep.subr.bf16.mxu0 0
  %73 = vmatpush2.bf16.msra.mxu0 0
  %74 = vmatprep.subr.bf16.mxu0 0
  %75 = vmatpush2.bf16.msra.mxu0 0
  %76 = vmatprep.subr.bf16.mxu0 0
  %77 = vmatpush2.bf16.msra.mxu0 0
  %78 = vmatprep.subr.bf16.mxu0 0
  %79 = vmatpush2.bf16.msra.mxu0 0
  %80 = vmatprep.subr.bf16.mxu0 0
  %81 = vmatpush2.bf16.msra.mxu0 0
  %82 = vmatprep.mubr.bf16.mxu0 0
  %83 = vmatmul.mubr.bf16.gmra.mxu0 %v45
  %v84 = vpop.f32.mrf.mxu0
  %v85 = vadd.f32 0.0, %v84
  %v86 = vpop.f32.mrf.mxu0
  %v87 = vpop.f32.mrf.mxu0
  %v88 = vadd.f32 0.0, %v87
  %v89 = vpop.f32.mrf.mxu0
  %90 = vmatprep.mubr.bf16.mxu0 0
  %91 = vmatmul.mubr.bf16.gmra.mxu0 %v48
  %v92 = vpop.f32.mrf.mxu0
  %v93 = vadd.f32 0.0, %v92
  %v94 = vpop.f32.mrf.mxu0
  %v95 = vpop.f32.mrf.mxu0
  %v96 = vadd.f32 0.0, %v95
  %v97 = vpop.f32.mrf.mxu0
  %98 = vdwg.mxu0
  %v99 = vadd.f32 %v21, %v85
  %v100 = vadd.f32 %v22, %v88
  %v101 = vadd.f32 %v23, %v93
  %v102 = vadd.f32 %v24, %v96
  %vm103 = vcmask 261120
  %104 = vst.msk [vmem:[#allocation2] sm:$0xff] %vm103, %v99
  %105 = vst.msk [vmem:[#allocation2 + $0x8] sm:$0xff] %vm103, %v100
  %106 = vst.msk [vmem:[#allocation2 + $0x10] sm:$0xff] %vm103, %v101
  %107 = vst.msk [vmem:[#allocation2 + $0x18] sm:$0xff] %vm103, %v102
  // Predicated region
  $region14: #{mla_forward.6} parent=0 // pred_check
    %p108 = pneg %p12
  $region15: #{mla_forward.6} parent=0 // pred_check_branch
    %110 = sbr.rel (%p108) target = $region17
  $region16: #{mla_forward.6} parent=0 // pred_region
    %v111 = vld [vmem:[#allocation2] sm:$0xff]
    %v112 = vld [vmem:[#allocation2 + $0x8] sm:$0xff]
    %v113 = vld [vmem:[#allocation2 + $0x10] sm:$0xff]
    %v114 = vld [vmem:[#allocation2 + $0x18] sm:$0xff]
    %115 = vst.msk [vmem:[%s2] sm:$0xff] %vm103, %v111
    %116 = vst.msk [vmem:[%s2 + $0x8] sm:$0xff] %vm103, %v112
    %117 = vst.msk [vmem:[%s2 + $0x10] sm:$0xff] %vm103, %v113
    %118 = vst.msk [vmem:[%s2 + $0x18] sm:$0xff] %vm103, %v114
  $region17: #{mla_forward.6} parent=0 // pred_fallthru
    _
  // Predicated region
  $region18: #{mla_forward.6} parent=0 // pred_check
    _
  $region19: #{mla_forward.6} parent=0 // pred_check_branch
    %120 = sbr.rel (0) target = $region21
  $region20: #{mla_forward.6} parent=0 // pred_region
    _
  $region21: #{mla_forward.6} parent=0 // pred_fallthru
    _
  // Predicated region
  $region22: #{mla_forward.6} parent=0 // pred_check
    _
  $region23: #{mla_forward.6} parent=0 // pred_check_branch
    %122 = sbr.rel (0) target = $region25
  $region24: #{mla_forward.6} parent=0 // pred_region
    _
  $region25: #{mla_forward.6} parent=0 // pred_fallthru
    _

// kernel: mla_forward.7
$region0: #{mla_forward.7}
  #allocation0 [shape = 'u32[]', space=smem, size = 0x4, offset = 0x4, fixed_abs, tag = 'smem constant byte address 0x4 - core index']
  #allocation1 [shape = 'u32[144,128]{1,0:T(1,128)}', space=vmem, size = 0x12000, scoped, tag = 'internal scratch']
  #allocation2 [shape = 'bf16[32,32]{1,0:T(8,128)(2,1)}', space=vmem, size = 0x2000, scoped, tag = 'scratch operand']
  %s0 = inlined_call_operand.vmem [shape: f32[32,32], index: 0, kind: input, shape index: {}]
  %s1 = inlined_call_operand.vmem [shape: f32[1,32], index: 1, kind: input, shape index: {}]
  %s2 = inlined_call_operand.vmem [shape: f32[32,192], index: 2, kind: input, shape index: {}]
  %s3 = inlined_call_operand.vmem [shape: f32[32,192], index: 3, kind: output, shape index: {}]
  %s4 = sld [smem:[#allocation0]]
  $region26: #{mla_forward.7} parent=0
    _
  %s6 = ssub.s32 1, %s4
  %s7 = scalar_select 0, %s6, %s4
  // Predicated region
  $region2: #{mla_forward.7} parent=0 // pred_check
    _
  $region3: #{mla_forward.7} parent=0 // pred_check_branch
    %9 = sbr.rel (0) target = $region5
  $region4: #{mla_forward.7} parent=0 // pred_region
    _
  $region5: #{mla_forward.7} parent=0 // pred_fallthru
    _
  // Predicated region
  $region6: #{mla_forward.7} parent=0 // pred_check
    _
  $region7: #{mla_forward.7} parent=0 // pred_check_branch
    %11 = sbr.rel (0) target = $region9
  $region8: #{mla_forward.7} parent=0 // pred_region
    _
  $region9: #{mla_forward.7} parent=0 // pred_fallthru
    _
  // Predicated region
  $region10: #{mla_forward.7} parent=0 // pred_check
    _
  $region11: #{mla_forward.7} parent=0 // pred_check_branch
    %13 = sbr.rel (0) target = $region13
  $region12: #{mla_forward.7} parent=0 // pred_region
    _
  $region13: #{mla_forward.7} parent=0 // pred_fallthru
    _
  %p15 = scmp.eq.s32.totalorder 0, 0
  // Predicated region
  $region14: #{mla_forward.7} parent=0 // pred_check
    %p16 = pneg %p15
  $region15: #{mla_forward.7} parent=0 // pred_check_branch
    %18 = sbr.rel (%p16) target = $region17
  $region16: #{mla_forward.7} parent=0 // pred_region
    %v19 = vld [vmem:[%s0] sm:$0xff]
    %v20 = vld [vmem:[%s0 + $0x8] sm:$0xff]
    %v21 = vld [vmem:[%s0 + $0x10] sm:$0xff]
    %v22 = vld [vmem:[%s0 + $0x18] sm:$0xff]
    %v23 = vmul.f32 %v19, %v19
    %v24 = vmul.f32 %v20, %v20
    %v25 = vmul.f32 %v21, %v21
    %v26 = vmul.f32 %v22, %v22
    %vm27 = vcmask 261120
    %v28 = vsel %vm27, %v23, 0.0
    %29 = vadd.xlane.f32.xlu0 %v28
    %v30 = vpop.xlane.xlu0 %29
    %v31 = vsel %vm27, %v24, 0.0
    %32 = vadd.xlane.f32.xlu0 %v31
    %v33 = vpop.xlane.xlu0 %32
    %v34 = vsel %vm27, %v25, 0.0
    %35 = vadd.xlane.f32.xlu0 %v34
    %v36 = vpop.xlane.xlu0 %35
    %v37 = vsel %vm27, %v26, 0.0
    %38 = vadd.xlane.f32.xlu0 %v37
    %v39 = vpop.xlane.xlu0 %38
    %v40 = vrcp.pop 32.0
    %v41 = vmul.f32 %v30, %v40
    %v42 = vmul.f32 %v33, %v40
    %v43 = vmul.f32 %v36, %v40
    %v44 = vmul.f32 %v39, %v40
    %v45 = vadd.f32 %v41, 1e-06
    %v46 = vadd.f32 %v42, 1e-06
    %v47 = vadd.f32 %v43, 1e-06
    %v48 = vadd.f32 %v44, 1e-06
    %v49 = vrsqrt.pop %v45
    %v50 = vrsqrt.pop %v46
    %v51 = vrsqrt.pop %v47
    %v52 = vrsqrt.pop %v48
    %v53 = vmul.f32 %v19, %v49
    %v54 = vmul.f32 %v20, %v50
    %v55 = vmul.f32 %v21, %v51
    %v56 = vmul.f32 %v22, %v52
    %v57 = vld [vmem:[%s1] sm:$0x1]
    %v59 = vlaneseq
    %v60 = vshrl.u32 %v59, 7
    %v61 = vsub.s32 0, %v60
    %v62 = vrot.slane %v57, %v61
    %v64 = vmul.f32 %v53, %v62
    %v65 = vmul.f32 %v54, %v62
    %v66 = vmul.f32 %v55, %v62
    %v67 = vmul.f32 %v56, %v62
    %v68 = vpack.c.bf16 %v65, %v64
    %v69 = vpack.c.bf16 %v67, %v66
    %v72 = vunpack.c.l.b16 %v68
    %v73 = vunpack.c.h.b16 %v68
    %v74 = vunpack.c.l.b16 %v69
    %v75 = vunpack.c.h.b16 %v69
    %v76 = vpack.c.b16 %v72, %v72
    %v77 = vpack.c.b16 %v73, %v73
    %v78 = vpack.c.b16 %v74, %v74
    %v79 = vpack.c.b16 %v75, %v75
    %vm84 = vcmask 257024
    %85 = vst.msk [vmem:[#allocation2] sm:$0xf] %vm84, %v76
    %86 = vst.msk [vmem:[#allocation2 + $0x4] sm:$0xf] %vm84, %v77
    %87 = vst.msk [vmem:[#allocation2 + $0x8] sm:$0xf] %vm84, %v78
    %88 = vst.msk [vmem:[#allocation2 + $0xc] sm:$0xf] %vm84, %v79
  $region17: #{mla_forward.7} parent=0 // pred_fallthru
    _
  %v89 = vld [vmem:[#allocation2] sm:$0xf]
  %v90 = vld [vmem:[#allocation2 + $0x4] sm:$0xf]
  %v91 = vld [vmem:[#allocation2 + $0x8] sm:$0xf]
  %v92 = vld [vmem:[#allocation2 + $0xc] sm:$0xf]
  %v93 = vld [vmem:[%s2] sm:$0xff]
  %v94 = vld [vmem:[%s2 + $0x8] sm:$0xff]
  %v95 = vld [vmem:[%s2 + $0x10] sm:$0xff]
  %v96 = vld [vmem:[%s2 + $0x18] sm:$0xff]
  %v97 = vld [vmem:[%s2 + $0x20] sm:$0xff]
  %v98 = vld [vmem:[%s2 + $0x28] sm:$0xff]
  %v99 = vld [vmem:[%s2 + $0x30] sm:$0xff]
  %v100 = vld [vmem:[%s2 + $0x38] sm:$0xff]
  %v101 = vpack.c.bf16 %v95, %v93
  %v102 = vpack.c.bf16 %v96, %v94
  %v103 = vpack.c.bf16 %v99, %v97
  %v104 = vpack.c.bf16 %v100, %v98
  %v109 = vunpack.c.l.b16 %v89
  %v110 = vunpack.c.l.b16 %v90
  %v111 = vunpack.c.l.b16 %v91
  %v112 = vunpack.c.l.b16 %v92
  %v113 = vpack.c.b16 %v110, %v109
  %v114 = vpack.c.b16 %v112, %v111
  %vm115 = vcmask 261120
  %v117 = vsel %vm115, %v113, 0
  %v120 = vsel %vm115, %v114, 0
  %122 = vmatprep.subr.bf16.mxu0 0
  %123 = vmatpush1.bf16.msra.mxu0 0
  %124 = vmatprep.subr.bf16.mxu0 0
  %125 = vmatpush1.bf16.msra.mxu0 0
  %126 = vmatprep.subr.bf16.mxu0 0
  %127 = vmatpush1.bf16.msra.mxu0 0
  %128 = vmatprep.subr.bf16.mxu0 0
  %129 = vmatpush1.bf16.msra.mxu0 0
  %130 = vmatprep.subr.bf16.mxu0 0
  %131 = vmatpush1.bf16.msra.mxu0 0
  %132 = vmatprep.subr.bf16.mxu0 0
  %133 = vmatpush1.bf16.msra.mxu0 0
  %134 = vmatprep.subr.bf16.mxu0 %v104
  %135 = vmatpush1.bf16.msra.mxu0 %v103
  %136 = vmatprep.subr.bf16.mxu0 %v102
  %137 = vmatpush1.bf16.msra.mxu0 %v101
  %138 = vmatprep.subr.bf16.mxu0 0
  %139 = vmatpush2.bf16.msra.mxu0 0
  %140 = vmatprep.subr.bf16.mxu0 0
  %141 = vmatpush2.bf16.msra.mxu0 0
  %142 = vmatprep.subr.bf16.mxu0 0
  %143 = vmatpush2.bf16.msra.mxu0 0
  %144 = vmatprep.subr.bf16.mxu0 0
  %145 = vmatpush2.bf16.msra.mxu0 0
  %146 = vmatprep.subr.bf16.mxu0 0
  %147 = vmatpush2.bf16.msra.mxu0 0
  %148 = vmatprep.subr.bf16.mxu0 0
  %149 = vmatpush2.bf16.msra.mxu0 0
  %150 = vmatprep.subr.bf16.mxu0 0
  %151 = vmatpush2.bf16.msra.mxu0 0
  %152 = vmatprep.subr.bf16.mxu0 0
  %153 = vmatpush2.bf16.msra.mxu0 0
  %154 = vmatprep.mubr.bf16.mxu0 0
  %155 = vmatmul.mubr.bf16.gmra.mxu0 %v117
  %v156 = vpop.f32.mrf.mxu0
  %v157 = vadd.f32 0.0, %v156
  %v158 = vpop.f32.mrf.mxu0
  %v159 = vadd.f32 0.0, %v158
  %v160 = vpop.f32.mrf.mxu0
  %v161 = vadd.f32 0.0, %v160
  %v162 = vpop.f32.mrf.mxu0
  %v163 = vadd.f32 0.0, %v162
  %164 = vmatprep.mubr.bf16.mxu0 0
  %165 = vmatmul.mubr.bf16.gmra.mxu0 %v120
  %v166 = vpop.f32.mrf.mxu0
  %v167 = vadd.f32 0.0, %v166
  %v168 = vpop.f32.mrf.mxu0
  %v169 = vadd.f32 0.0, %v168
  %v170 = vpop.f32.mrf.mxu0
  %v171 = vadd.f32 0.0, %v170
  %v172 = vpop.f32.mrf.mxu0
  %v173 = vadd.f32 0.0, %v172
  %174 = vdwg.mxu0
  %175 = vst [vmem:[%s3] sm:$0xff] %v157
  %vm176 = vcmask 523264
  %177 = vst.msk [vmem:[%s3 + $0x8] sm:$0xff] %vm176, %v159
  %178 = vst [vmem:[%s3 + $0x10] sm:$0xff] %v161
  %179 = vst.msk [vmem:[%s3 + $0x18] sm:$0xff] %vm176, %v163
  %180 = vst [vmem:[%s3 + $0x20] sm:$0xff] %v167
  %181 = vst.msk [vmem:[%s3 + $0x28] sm:$0xff] %vm176, %v169
  %182 = vst [vmem:[%s3 + $0x30] sm:$0xff] %v171
  %183 = vst.msk [vmem:[%s3 + $0x38] sm:$0xff] %vm176, %v173
  // Predicated region
  $region18: #{mla_forward.7} parent=0 // pred_check
    _
  $region19: #{mla_forward.7} parent=0 // pred_check_branch
    %185 = sbr.rel (0) target = $region21
  $region20: #{mla_forward.7} parent=0 // pred_region
    _
  $region21: #{mla_forward.7} parent=0 // pred_fallthru
    _
  // Predicated region
  $region22: #{mla_forward.7} parent=0 // pred_check
    _
  $region23: #{mla_forward.7} parent=0 // pred_check_branch
    %187 = sbr.rel (0) target = $region25
  $region24: #{mla_forward.7} parent=0 // pred_region
    _
  $region25: #{mla_forward.7} parent=0 // pred_fallthru
    _

// kernel: mla_forward.8
$region0: #{mla_forward.8}
  #allocation0 [shape = 'u32[]', space=smem, size = 0x4, offset = 0x4, fixed_abs, tag = 'smem constant byte address 0x4 - core index']
  #allocation1 [shape = 'u32[144,128]{1,0:T(1,128)}', space=vmem, size = 0x12000, scoped, tag = 'internal scratch']
  #allocation2 [shape = 'f32[32,48]{1,0:T(8,128)}', space=vmem, size = 0x4000, scoped, tag = 'scratch operand']
  %s0 = inlined_call_operand.vmem [shape: f32[32,64], index: 0, kind: input, shape index: {}]
  %s1 = inlined_call_operand.vmem [shape: f32[64,48], index: 1, kind: input, shape index: {}]
  %s2 = inlined_call_operand.vmem [shape: f32[32,48], index: 2, kind: output, shape index: {}]
  %s3 = sld [smem:[#allocation0]]
  $region26: #{mla_forward.8} parent=0
    _
  %s5 = ssub.s32 1, %s3
  %s6 = scalar_select 0, %s5, %s3
  // Predicated region
  $region2: #{mla_forward.8} parent=0 // pred_check
    _
  $region3: #{mla_forward.8} parent=0 // pred_check_branch
    %8 = sbr.rel (0) target = $region5
  $region4: #{mla_forward.8} parent=0 // pred_region
    _
  $region5: #{mla_forward.8} parent=0 // pred_fallthru
    _
  // Predicated region
  $region6: #{mla_forward.8} parent=0 // pred_check
    _
  $region7: #{mla_forward.8} parent=0 // pred_check_branch
    %10 = sbr.rel (0) target = $region9
  $region8: #{mla_forward.8} parent=0 // pred_region
    _
  $region9: #{mla_forward.8} parent=0 // pred_fallthru
    _
  %p12 = scmp.eq.s32.totalorder 0, 0
  // Predicated region
  $region10: #{mla_forward.8} parent=0 // pred_check
    %p13 = pneg %p12
  $region11: #{mla_forward.8} parent=0 // pred_check_branch
    %15 = sbr.rel (%p13) target = $region13
  $region12: #{mla_forward.8} parent=0 // pred_region
    %vm16 = vcmask 392192
    %17 = vst.msk [vmem:[#allocation2] sm:$0xff] %vm16, 0.0
    %18 = vst.msk [vmem:[#allocation2 + $0x8] sm:$0xff] %vm16, 0.0
    %19 = vst.msk [vmem:[#allocation2 + $0x10] sm:$0xff] %vm16, 0.0
    %20 = vst.msk [vmem:[#allocation2 + $0x18] sm:$0xff] %vm16, 0.0
  $region13: #{mla_forward.8} parent=0 // pred_fallthru
    _
  %v21 = vld [vmem:[#allocation2] sm:$0xff]
  %v22 = vld [vmem:[#allocation2 + $0x8] sm:$0xff]
  %v23 = vld [vmem:[#allocation2 + $0x10] sm:$0xff]
  %v24 = vld [vmem:[#allocation2 + $0x18] sm:$0xff]
  %v25 = vld [vmem:[%s0] sm:$0xff]
  %v26 = vld [vmem:[%s0 + $0x8] sm:$0xff]
  %v27 = vld [vmem:[%s0 + $0x10] sm:$0xff]
  %v28 = vld [vmem:[%s0 + $0x18] sm:$0xff]
  %v29 = vpack.c.bf16 %v26, %v25
  %v30 = vpack.c.bf16 %v28, %v27
  %v31 = vld [vmem:[%s1] sm:$0xff]
  %v32 = vld [vmem:[%s1 + $0x8] sm:$0xff]
  %v33 = vld [vmem:[%s1 + $0x10] sm:$0xff]
  %v34 = vld [vmem:[%s1 + $0x18] sm:$0xff]
  %v35 = vld [vmem:[%s1 + $0x20] sm:$0xff]
  %v36 = vld [vmem:[%s1 + $0x28] sm:$0xff]
  %v37 = vld [vmem:[%s1 + $0x30] sm:$0xff]
  %v38 = vld [vmem:[%s1 + $0x38] sm:$0xff]
  %v39 = vpack.c.bf16 %v32, %v31
  %v40 = vpack.c.bf16 %v34, %v33
  %v41 = vpack.c.bf16 %v36, %v35
  %v42 = vpack.c.bf16 %v38, %v37
  %vm43 = vcmask 523264
  %v45 = vsel %vm43, %v29, 0
  %v48 = vsel %vm43, %v30, 0
  %50 = vmatprep.subr.bf16.mxu0 0
  %51 = vmatpush1.bf16.msra.mxu0 0
  %52 = vmatprep.subr.bf16.mxu0 0
  %53 = vmatpush1.bf16.msra.mxu0 0
  %54 = vmatprep.subr.bf16.mxu0 0
  %55 = vmatpush1.bf16.msra.mxu0 0
  %56 = vmatprep.subr.bf16.mxu0 0
  %57 = vmatpush1.bf16.msra.mxu0 0
  %58 = vmatprep.subr.bf16.mxu0 0
  %59 = vmatpush1.bf16.msra.mxu0 %v42
  %60 = vmatprep.subr.bf16.mxu0 0
  %61 = vmatpush1.bf16.msra.mxu0 %v41
  %62 = vmatprep.subr.bf16.mxu0 0
  %63 = vmatpush1.bf16.msra.mxu0 %v40
  %64 = vmatprep.subr.bf16.mxu0 0
  %65 = vmatpush1.bf16.msra.mxu0 %v39
  %66 = vmatprep.subr.bf16.mxu0 0
  %67 = vmatpush2.bf16.msra.mxu0 0
  %68 = vmatprep.subr.bf16.mxu0 0
  %69 = vmatpush2.bf16.msra.mxu0 0
  %70 = vmatprep.subr.bf16.mxu0 0
  %71 = vmatpush2.bf16.msra.mxu0 0
  %72 = vmatprep.subr.bf16.mxu0 0
  %73 = vmatpush2.bf16.msra.mxu0 0
  %74 = vmatprep.subr.bf16.mxu0 0
  %75 = vmatpush2.bf16.msra.mxu0 0
  %76 = vmatprep.subr.bf16.mxu0 0
  %77 = vmatpush2.bf16.msra.mxu0 0
  %78 = vmatprep.subr.bf16.mxu0 0
  %79 = vmatpush2.bf16.msra.mxu0 0
  %80 = vmatprep.subr.bf16.mxu0 0
  %81 = vmatpush2.bf16.msra.mxu0 0
  %82 = vmatprep.mubr.bf16.mxu0 0
  %83 = vmatmul.mubr.bf16.gmra.mxu0 %v45
  %v84 = vpop.f32.mrf.mxu0
  %v85 = vadd.f32 0.0, %v84
  %v86 = vpop.f32.mrf.mxu0
  %v87 = vpop.f32.mrf.mxu0
  %v88 = vadd.f32 0.0, %v87
  %v89 = vpop.f32.mrf.mxu0
  %90 = vmatprep.mubr.bf16.mxu0 0
  %91 = vmatmul.mubr.bf16.gmra.mxu0 %v48
  %v92 = vpop.f32.mrf.mxu0
  %v93 = vadd.f32 0.0, %v92
  %v94 = vpop.f32.mrf.mxu0
  %v95 = vpop.f32.mrf.mxu0
  %v96 = vadd.f32 0.0, %v95
  %v97 = vpop.f32.mrf.mxu0
  %98 = vdwg.mxu0
  %v99 = vadd.f32 %v21, %v85
  %v100 = vadd.f32 %v22, %v88
  %v101 = vadd.f32 %v23, %v93
  %v102 = vadd.f32 %v24, %v96
  %vm103 = vcmask 392192
  %104 = vst.msk [vmem:[#allocation2] sm:$0xff] %vm103, %v99
  %105 = vst.msk [vmem:[#allocation2 + $0x8] sm:$0xff] %vm103, %v100
  %106 = vst.msk [vmem:[#allocation2 + $0x10] sm:$0xff] %vm103, %v101
  %107 = vst.msk [vmem:[#allocation2 + $0x18] sm:$0xff] %vm103, %v102
  // Predicated region
  $region14: #{mla_forward.8} parent=0 // pred_check
    %p108 = pneg %p12
  $region15: #{mla_forward.8} parent=0 // pred_check_branch
    %110 = sbr.rel (%p108) target = $region17
  $region16: #{mla_forward.8} parent=0 // pred_region
    %v111 = vld [vmem:[#allocation2] sm:$0xff]
    %v112 = vld [vmem:[#allocation2 + $0x8] sm:$0xff]
    %v113 = vld [vmem:[#allocation2 + $0x10] sm:$0xff]
    %v114 = vld [vmem:[#allocation2 + $0x18] sm:$0xff]
    %115 = vst.msk [vmem:[%s2] sm:$0xff] %vm103, %v111
    %116 = vst.msk [vmem:[%s2 + $0x8] sm:$0xff] %vm103, %v112
    %117 = vst.msk [vmem:[%s2 + $0x10] sm:$0xff] %vm103, %v113
    %118 = vst.msk [vmem:[%s2 + $0x18] sm:$0xff] %vm103, %v114
  $region17: #{mla_forward.8} parent=0 // pred_fallthru
    _
  // Predicated region
  $region18: #{mla_forward.8} parent=0 // pred_check
    _
  $region19: #{mla_forward.8} parent=0 // pred_check_branch
    %120 = sbr.rel (0) target = $region21
  $region20: #{mla_forward.8} parent=0 // pred_region
    _
  $region21: #{mla_forward.8} parent=0 // pred_fallthru
    _
  // Predicated region
  $region22: #{mla_forward.8} parent=0 // pred_check
    _
  $region23: #{mla_forward.8} parent=0 // pred_check_branch
    %122 = sbr.rel (0) target = $region25
  $region24: #{mla_forward.8} parent=0 // pred_region
    _
  $region25: #{mla_forward.8} parent=0 // pred_fallthru
    _

// kernel: mla_forward.9
$region0: #{mla_forward.9}
  #allocation0 [shape = 'u32[]', space=smem, size = 0x4, offset = 0x4, fixed_abs, tag = 'smem constant byte address 0x4 - core index']
  #allocation1 [shape = 'u32[144,128]{1,0:T(1,128)}', space=vmem, size = 0x12000, scoped, tag = 'internal scratch']
  #allocation2 [shape = 'bf16[32,32]{1,0:T(8,128)(2,1)}', space=vmem, size = 0x2000, scoped, tag = 'scratch operand']
  %s0 = inlined_call_operand.vmem [shape: f32[32,32], index: 0, kind: input, shape index: {}]
  %s1 = inlined_call_operand.vmem [shape: f32[1,32], index: 1, kind: input, shape index: {}]
  %s2 = inlined_call_operand.vmem [shape: f32[32,256], index: 2, kind: input, shape index: {}]
  %s3 = inlined_call_operand.vmem [shape: f32[32,256], index: 3, kind: output, shape index: {}]
  %s4 = sld [smem:[#allocation0]]
  $region26: #{mla_forward.9} parent=0
    _
  %s6 = ssub.s32 1, %s4
  %s7 = scalar_select 0, %s6, %s4
  // Predicated region
  $region2: #{mla_forward.9} parent=0 // pred_check
    _
  $region3: #{mla_forward.9} parent=0 // pred_check_branch
    %9 = sbr.rel (0) target = $region5
  $region4: #{mla_forward.9} parent=0 // pred_region
    _
  $region5: #{mla_forward.9} parent=0 // pred_fallthru
    _
  // Predicated region
  $region6: #{mla_forward.9} parent=0 // pred_check
    _
  $region7: #{mla_forward.9} parent=0 // pred_check_branch
    %11 = sbr.rel (0) target = $region9
  $region8: #{mla_forward.9} parent=0 // pred_region
    _
  $region9: #{mla_forward.9} parent=0 // pred_fallthru
    _
  // Predicated region
  $region10: #{mla_forward.9} parent=0 // pred_check
    _
  $region11: #{mla_forward.9} parent=0 // pred_check_branch
    %13 = sbr.rel (0) target = $region13
  $region12: #{mla_forward.9} parent=0 // pred_region
    _
  $region13: #{mla_forward.9} parent=0 // pred_fallthru
    _
  %p15 = scmp.eq.s32.totalorder 0, 0
  // Predicated region
  $region14: #{mla_forward.9} parent=0 // pred_check
    %p16 = pneg %p15
  $region15: #{mla_forward.9} parent=0 // pred_check_branch
    %18 = sbr.rel (%p16) target = $region17
  $region16: #{mla_forward.9} parent=0 // pred_region
    %v19 = vld [vmem:[%s0] sm:$0xff]
    %v20 = vld [vmem:[%s0 + $0x8] sm:$0xff]
    %v21 = vld [vmem:[%s0 + $0x10] sm:$0xff]
    %v22 = vld [vmem:[%s0 + $0x18] sm:$0xff]
    %v23 = vmul.f32 %v19, %v19
    %v24 = vmul.f32 %v20, %v20
    %v25 = vmul.f32 %v21, %v21
    %v26 = vmul.f32 %v22, %v22
    %vm27 = vcmask 261120
    %v28 = vsel %vm27, %v23, 0.0
    %29 = vadd.xlane.f32.xlu0 %v28
    %v30 = vpop.xlane.xlu0 %29
    %v31 = vsel %vm27, %v24, 0.0
    %32 = vadd.xlane.f32.xlu0 %v31
    %v33 = vpop.xlane.xlu0 %32
    %v34 = vsel %vm27, %v25, 0.0
    %35 = vadd.xlane.f32.xlu0 %v34
    %v36 = vpop.xlane.xlu0 %35
    %v37 = vsel %vm27, %v26, 0.0
    %38 = vadd.xlane.f32.xlu0 %v37
    %v39 = vpop.xlane.xlu0 %38
    %v40 = vrcp.pop 32.0
    %v41 = vmul.f32 %v30, %v40
    %v42 = vmul.f32 %v33, %v40
    %v43 = vmul.f32 %v36, %v40
    %v44 = vmul.f32 %v39, %v40
    %v45 = vadd.f32 %v41, 1e-06
    %v46 = vadd.f32 %v42, 1e-06
    %v47 = vadd.f32 %v43, 1e-06
    %v48 = vadd.f32 %v44, 1e-06
    %v49 = vrsqrt.pop %v45
    %v50 = vrsqrt.pop %v46
    %v51 = vrsqrt.pop %v47
    %v52 = vrsqrt.pop %v48
    %v53 = vmul.f32 %v19, %v49
    %v54 = vmul.f32 %v20, %v50
    %v55 = vmul.f32 %v21, %v51
    %v56 = vmul.f32 %v22, %v52
    %v57 = vld [vmem:[%s1] sm:$0x1]
    %v59 = vlaneseq
    %v60 = vshrl.u32 %v59, 7
    %v61 = vsub.s32 0, %v60
    %v62 = vrot.slane %v57, %v61
    %v64 = vmul.f32 %v53, %v62
    %v65 = vmul.f32 %v54, %v62
    %v66 = vmul.f32 %v55, %v62
    %v67 = vmul.f32 %v56, %v62
    %v68 = vpack.c.bf16 %v65, %v64
    %v69 = vpack.c.bf16 %v67, %v66
    %v72 = vunpack.c.l.b16 %v68
    %v73 = vunpack.c.h.b16 %v68
    %v74 = vunpack.c.l.b16 %v69
    %v75 = vunpack.c.h.b16 %v69
    %v76 = vpack.c.b16 %v72, %v72
    %v77 = vpack.c.b16 %v73, %v73
    %v78 = vpack.c.b16 %v74, %v74
    %v79 = vpack.c.b16 %v75, %v75
    %vm84 = vcmask 257024
    %85 = vst.msk [vmem:[#allocation2] sm:$0xf] %vm84, %v76
    %86 = vst.msk [vmem:[#allocation2 + $0x4] sm:$0xf] %vm84, %v77
    %87 = vst.msk [vmem:[#allocation2 + $0x8] sm:$0xf] %vm84, %v78
    %88 = vst.msk [vmem:[#allocation2 + $0xc] sm:$0xf] %vm84, %v79
  $region17: #{mla_forward.9} parent=0 // pred_fallthru
    _
  %v89 = vld [vmem:[#allocation2] sm:$0xf]
  %v90 = vld [vmem:[#allocation2 + $0x4] sm:$0xf]
  %v91 = vld [vmem:[#allocation2 + $0x8] sm:$0xf]
  %v92 = vld [vmem:[#allocation2 + $0xc] sm:$0xf]
  %v93 = vld [vmem:[%s2] sm:$0xff]
  %v94 = vld [vmem:[%s2 + $0x8] sm:$0xff]
  %v95 = vld [vmem:[%s2 + $0x10] sm:$0xff]
  %v96 = vld [vmem:[%s2 + $0x18] sm:$0xff]
  %v97 = vld [vmem:[%s2 + $0x20] sm:$0xff]
  %v98 = vld [vmem:[%s2 + $0x28] sm:$0xff]
  %v99 = vld [vmem:[%s2 + $0x30] sm:$0xff]
  %v100 = vld [vmem:[%s2 + $0x38] sm:$0xff]
  %v101 = vpack.c.bf16 %v95, %v93
  %v102 = vpack.c.bf16 %v96, %v94
  %v103 = vpack.c.bf16 %v99, %v97
  %v104 = vpack.c.bf16 %v100, %v98
  %v109 = vunpack.c.l.b16 %v89
  %v110 = vunpack.c.l.b16 %v90
  %v111 = vunpack.c.l.b16 %v91
  %v112 = vunpack.c.l.b16 %v92
  %v113 = vpack.c.b16 %v110, %v109
  %v114 = vpack.c.b16 %v112, %v111
  %vm115 = vcmask 261120
  %v117 = vsel %vm115, %v113, 0
  %v120 = vsel %vm115, %v114, 0
  %122 = vmatprep.subr.bf16.mxu0 0
  %123 = vmatpush1.bf16.msra.mxu0 0
  %124 = vmatprep.subr.bf16.mxu0 0
  %125 = vmatpush1.bf16.msra.mxu0 0
  %126 = vmatprep.subr.bf16.mxu0 0
  %127 = vmatpush1.bf16.msra.mxu0 0
  %128 = vmatprep.subr.bf16.mxu0 0
  %129 = vmatpush1.bf16.msra.mxu0 0
  %130 = vmatprep.subr.bf16.mxu0 0
  %131 = vmatpush1.bf16.msra.mxu0 0
  %132 = vmatprep.subr.bf16.mxu0 0
  %133 = vmatpush1.bf16.msra.mxu0 0
  %134 = vmatprep.subr.bf16.mxu0 %v104
  %135 = vmatpush1.bf16.msra.mxu0 %v103
  %136 = vmatprep.subr.bf16.mxu0 %v102
  %137 = vmatpush1.bf16.msra.mxu0 %v101
  %138 = vmatprep.subr.bf16.mxu0 0
  %139 = vmatpush2.bf16.msra.mxu0 0
  %140 = vmatprep.subr.bf16.mxu0 0
  %141 = vmatpush2.bf16.msra.mxu0 0
  %142 = vmatprep.subr.bf16.mxu0 0
  %143 = vmatpush2.bf16.msra.mxu0 0
  %144 = vmatprep.subr.bf16.mxu0 0
  %145 = vmatpush2.bf16.msra.mxu0 0
  %146 = vmatprep.subr.bf16.mxu0 0
  %147 = vmatpush2.bf16.msra.mxu0 0
  %148 = vmatprep.subr.bf16.mxu0 0
  %149 = vmatpush2.bf16.msra.mxu0 0
  %150 = vmatprep.subr.bf16.mxu0 0
  %151 = vmatpush2.bf16.msra.mxu0 0
  %152 = vmatprep.subr.bf16.mxu0 0
  %153 = vmatpush2.bf16.msra.mxu0 0
  %154 = vmatprep.mubr.bf16.mxu0 0
  %155 = vmatmul.mubr.bf16.gmra.mxu0 %v117
  %v156 = vpop.f32.mrf.mxu0
  %v157 = vadd.f32 0.0, %v156
  %v158 = vpop.f32.mrf.mxu0
  %v159 = vadd.f32 0.0, %v158
  %v160 = vpop.f32.mrf.mxu0
  %v161 = vadd.f32 0.0, %v160
  %v162 = vpop.f32.mrf.mxu0
  %v163 = vadd.f32 0.0, %v162
  %164 = vmatprep.mubr.bf16.mxu0 0
  %165 = vmatmul.mubr.bf16.gmra.mxu0 %v120
  %v166 = vpop.f32.mrf.mxu0
  %v167 = vadd.f32 0.0, %v166
  %v168 = vpop.f32.mrf.mxu0
  %v169 = vadd.f32 0.0, %v168
  %v170 = vpop.f32.mrf.mxu0
  %v171 = vadd.f32 0.0, %v170
  %v172 = vpop.f32.mrf.mxu0
  %v173 = vadd.f32 0.0, %v172
  %174 = vdwg.mxu0
  %175 = vst [vmem:[%s3] sm:$0xff] %v157
  %176 = vst [vmem:[%s3 + $0x8] sm:$0xff] %v159
  %177 = vst [vmem:[%s3 + $0x10] sm:$0xff] %v161
  %178 = vst [vmem:[%s3 + $0x18] sm:$0xff] %v163
  %179 = vst [vmem:[%s3 + $0x20] sm:$0xff] %v167
  %180 = vst [vmem:[%s3 + $0x28] sm:$0xff] %v169
  %181 = vst [vmem:[%s3 + $0x30] sm:$0xff] %v171
  %182 = vst [vmem:[%s3 + $0x38] sm:$0xff] %v173
  // Predicated region
  $region18: #{mla_forward.9} parent=0 // pred_check
    _
  $region19: #{mla_forward.9} parent=0 // pred_check_branch
    %184 = sbr.rel (0) target = $region21
  $region20: #{mla_forward.9} parent=0 // pred_region
    _
  $region21: #{mla_forward.9} parent=0 // pred_fallthru
    _
  // Predicated region
  $region22: #{mla_forward.9} parent=0 // pred_check
    _
  $region23: #{mla_forward.9} parent=0 // pred_check_branch
    %186 = sbr.rel (0) target = $region25
  $region24: #{mla_forward.9} parent=0 // pred_region
    _
  $region25: #{mla_forward.9} parent=0 // pred_fallthru
    _

// kernel: mla_forward.11
$region0: #{mla_forward.11}
  #allocation0 [shape = 'u32[]', space=smem, size = 0x4, offset = 0x4, fixed_abs, tag = 'smem constant byte address 0x4 - core index']
  #allocation1 [shape = 'u32[144,128]{1,0:T(1,128)}', space=vmem, size = 0x12000, scoped, tag = 'internal scratch']
  #allocation2 [shape = 'f32[32,64]{1,0:T(8,128)}', space=vmem, size = 0x4000, scoped, tag = 'scratch operand']
  %s0 = inlined_call_operand.vmem [shape: f32[32,128], index: 0, kind: input, shape index: {}]
  %s1 = inlined_call_operand.vmem [shape: f32[128,64], index: 1, kind: input, shape index: {}]
  %s2 = inlined_call_operand.hbm [shape: f32[32,64], index: 2, kind: output, shape index: {}]
  %s3 = sld [smem:[#allocation0]]
  $region26: #{mla_forward.11} parent=0
    _
  %s5 = ssub.s32 1, %s3
  %s6 = scalar_select 0, %s5, %s3
  $region1: #{mla_forward.11} parent=0
    #allocation3 [shape = 'u8[16384]{0}', space=vmem, size = 0x4000, scoped, tag = 'output window, operand 0, single buffered']
    #allocation4 [shape = 's32[1]{0}', space=sflag, size = 0x4, scoped, tag = 'scoped memory for mla_forward.11']
    %7 = vsyncpa [#allocation4], 0
    // Predicated region
    $region2: #{mla_forward.11} parent=1 // pred_check
      _
    $region3: #{mla_forward.11} parent=1 // pred_check_branch
      %9 = sbr.rel (0) target = $region5
    $region4: #{mla_forward.11} parent=1 // pred_region
      _
    $region5: #{mla_forward.11} parent=1 // pred_fallthru
      _
    // Predicated region
    $region6: #{mla_forward.11} parent=1 // pred_check
      _
    $region7: #{mla_forward.11} parent=1 // pred_check_branch
      %11 = sbr.rel (0) target = $region9
    $region8: #{mla_forward.11} parent=1 // pred_region
      _
    $region9: #{mla_forward.11} parent=1 // pred_fallthru
      _
    %p13 = scmp.eq.s32.totalorder 0, 0
    // Predicated region
    $region10: #{mla_forward.11} parent=1 // pred_check
      %p14 = pneg %p13
    $region11: #{mla_forward.11} parent=1 // pred_check_branch
      %16 = sbr.rel (%p14) target = $region13
    $region12: #{mla_forward.11} parent=1 // pred_region
      %vm17 = vcmask 523264
      %18 = vst.msk [vmem:[#allocation2] sm:$0xff] %vm17, 0.0
      %19 = vst.msk [vmem:[#allocation2 + $0x8] sm:$0xff] %vm17, 0.0
      %20 = vst.msk [vmem:[#allocation2 + $0x10] sm:$0xff] %vm17, 0.0
      %21 = vst.msk [vmem:[#allocation2 + $0x18] sm:$0xff] %vm17, 0.0
    $region13: #{mla_forward.11} parent=1 // pred_fallthru
      _
    %v22 = vld [vmem:[#allocation2] sm:$0xff]
    %v23 = vld [vmem:[#allocation2 + $0x8] sm:$0xff]
    %v24 = vld [vmem:[#allocation2 + $0x10] sm:$0xff]
    %v25 = vld [vmem:[#allocation2 + $0x18] sm:$0xff]
    %v26 = vld [vmem:[%s0] sm:$0xff]
    %v27 = vld [vmem:[%s0 + $0x8] sm:$0xff]
    %v28 = vld [vmem:[%s0 + $0x10] sm:$0xff]
    %v29 = vld [vmem:[%s0 + $0x18] sm:$0xff]
    %v30 = vpack.c.bf16 %v27, %v26
    %v31 = vpack.c.bf16 %v29, %v28
    %v32 = vld [vmem:[%s1] sm:$0xff]
    %v33 = vld [vmem:[%s1 + $0x8] sm:$0xff]
    %v34 = vld [vmem:[%s1 + $0x10] sm:$0xff]
    %v35 = vld [vmem:[%s1 + $0x18] sm:$0xff]
    %v36 = vld [vmem:[%s1 + $0x20] sm:$0xff]
    %v37 = vld [vmem:[%s1 + $0x28] sm:$0xff]
    %v38 = vld [vmem:[%s1 + $0x30] sm:$0xff]
    %v39 = vld [vmem:[%s1 + $0x38] sm:$0xff]
    %v40 = vld [vmem:[%s1 + $0x40] sm:$0xff]
    %v41 = vld [vmem:[%s1 + $0x48] sm:$0xff]
    %v42 = vld [vmem:[%s1 + $0x50] sm:$0xff]
    %v43 = vld [vmem:[%s1 + $0x58] sm:$0xff]
    %v44 = vld [vmem:[%s1 + $0x60] sm:$0xff]
    %v45 = vld [vmem:[%s1 + $0x68] sm:$0xff]
    %v46 = vld [vmem:[%s1 + $0x70] sm:$0xff]
    %v47 = vld [vmem:[%s1 + $0x78] sm:$0xff]
    %v48 = vpack.c.bf16 %v33, %v32
    %v49 = vpack.c.bf16 %v35, %v34
    %v50 = vpack.c.bf16 %v37, %v36
    %v51 = vpack.c.bf16 %v39, %v38
    %v52 = vpack.c.bf16 %v41, %v40
    %v53 = vpack.c.bf16 %v43, %v42
    %v54 = vpack.c.bf16 %v45, %v44
    %v55 = vpack.c.bf16 %v47, %v46
    %56 = vmatprep.subr.bf16.mxu0 0
    %57 = vmatpush1.bf16.msra.mxu0 %v55
    %58 = vmatprep.subr.bf16.mxu0 0
    %59 = vmatpush1.bf16.msra.mxu0 %v54
    %60 = vmatprep.subr.bf16.mxu0 0
    %61 = vmatpush1.bf16.msra.mxu0 %v53
    %62 = vmatprep.subr.bf16.mxu0 0
    %63 = vmatpush1.bf16.msra.mxu0 %v52
    %64 = vmatprep.subr.bf16.mxu0 0
    %65 = vmatpush1.bf16.msra.mxu0 %v51
    %66 = vmatprep.subr.bf16.mxu0 0
    %67 = vmatpush1.bf16.msra.mxu0 %v50
    %68 = vmatprep.subr.bf16.mxu0 0
    %69 = vmatpush1.bf16.msra.mxu0 %v49
    %70 = vmatprep.subr.bf16.mxu0 0
    %71 = vmatpush1.bf16.msra.mxu0 %v48
    %72 = vmatprep.subr.bf16.mxu0 0
    %73 = vmatpush2.bf16.msra.mxu0 0
    %74 = vmatprep.subr.bf16.mxu0 0
    %75 = vmatpush2.bf16.msra.mxu0 0
    %76 = vmatprep.subr.bf16.mxu0 0
    %77 = vmatpush2.bf16.msra.mxu0 0
    %78 = vmatprep.subr.bf16.mxu0 0
    %79 = vmatpush2.bf16.msra.mxu0 0
    %80 = vmatprep.subr.bf16.mxu0 0
    %81 = vmatpush2.bf16.msra.mxu0 0
    %82 = vmatprep.subr.bf16.mxu0 0
    %83 = vmatpush2.bf16.msra.mxu0 0
    %84 = vmatprep.subr.bf16.mxu0 0
    %85 = vmatpush2.bf16.msra.mxu0 0
    %86 = vmatprep.subr.bf16.mxu0 0
    %87 = vmatpush2.bf16.msra.mxu0 0
    %88 = vmatprep.mubr.bf16.mxu0 0
    %89 = vmatmul.mubr.bf16.gmra.mxu0 %v30
    %v90 = vpop.f32.mrf.mxu0
    %v91 = vadd.f32 0.0, %v90
    %v92 = vpop.f32.mrf.mxu0
    %v93 = vpop.f32.mrf.mxu0
    %v94 = vadd.f32 0.0, %v93
    %v95 = vpop.f32.mrf.mxu0
    %96 = vmatprep.mubr.bf16.mxu0 0
    %97 = vmatmul.mubr.bf16.gmra.mxu0 %v31
    %v98 = vpop.f32.mrf.mxu0
    %v99 = vadd.f32 0.0, %v98
    %v100 = vpop.f32.mrf.mxu0
    %v101 = vpop.f32.mrf.mxu0
    %v102 = vadd.f32 0.0, %v101
    %v103 = vpop.f32.mrf.mxu0
    %104 = vdwg.mxu0
    %v105 = vadd.f32 %v22, %v91
    %v106 = vadd.f32 %v23, %v94
    %v107 = vadd.f32 %v24, %v99
    %v108 = vadd.f32 %v25, %v102
    %vm109 = vcmask 523264
    %110 = vst.msk [vmem:[#allocation2] sm:$0xff] %vm109, %v105
    %111 = vst.msk [vmem:[#allocation2 + $0x8] sm:$0xff] %vm109, %v106
    %112 = vst.msk [vmem:[#allocation2 + $0x10] sm:$0xff] %vm109, %v107
    %113 = vst.msk [vmem:[#allocation2 + $0x18] sm:$0xff] %vm109, %v108
    // Predicated region
    $region14: #{mla_forward.11} parent=1 // pred_check
      %p114 = pneg %p13
    $region15: #{mla_forward.11} parent=1 // pred_check_branch
      %116 = sbr.rel (%p114) target = $region17
    $region16: #{mla_forward.11} parent=1 // pred_region
      %v117 = vld [vmem:[#allocation2] sm:$0xff]
      %v118 = vld [vmem:[#allocation2 + $0x8] sm:$0xff]
      %v119 = vld [vmem:[#allocation2 + $0x10] sm:$0xff]
      %v120 = vld [vmem:[#allocation2 + $0x18] sm:$0xff]
      %121 = vst.msk [vmem:[#allocation3] sm:$0xff] %vm109, %v117
      %122 = vst.msk [vmem:[#allocation3 + $0x8] sm:$0xff] %vm109, %v118
      %123 = vst.msk [vmem:[#allocation3 + $0x10] sm:$0xff] %vm109, %v119
      %124 = vst.msk [vmem:[#allocation3 + $0x18] sm:$0xff] %vm109, %v120
    $region17: #{mla_forward.11} parent=1 // pred_fallthru
      _
    // Predicated region
    $region18: #{mla_forward.11} parent=1 // pred_check
      _
    $region19: #{mla_forward.11} parent=1 // pred_check_branch
      %126 = sbr.rel (0) target = $region21
    $region20: #{mla_forward.11} parent=1 // pred_region
      %s128 = ssub.s32 512, 512
      %129 = vsyncadd [#allocation4], %s128
      %s130 = sshll.u32 [#allocation3], 4
      %s131 = int_to_ptr.vmem [resolvable:$true] %s130
      %136 = dma.vmem_to_hbm [thread:$0]  %s131, 512, %s2, [#allocation4], 128, 128, 8
    $region21: #{mla_forward.11} parent=1 // pred_fallthru
      _
    // Predicated region
    $region22: #{mla_forward.11} parent=1 // pred_check
      _
    $region23: #{mla_forward.11} parent=1 // pred_check_branch
      %138 = sbr.rel (0) target = $region25
    $region24: #{mla_forward.11} parent=1 // pred_region
      %139 = dma.done [#allocation4], 512
    $region25: #{mla_forward.11} parent=1 // pred_fallthru
      _
    %140 = vsyncpa [#allocation4], 1

// kernel: mla_forward.10
$region0: #{mla_forward.10}
  #allocation0 [shape = 'u32[]', space=smem, size = 0x4, offset = 0x4, fixed_abs, tag = 'smem constant byte address 0x4 - core index']
  #allocation1 [shape = 'u32[144,128]{1,0:T(1,128)}', space=vmem, size = 0x12000, scoped, tag = 'internal scratch']
  %s0 = inlined_call_operand.vmem [shape: f32[2,4,16,48], index: 0, kind: input, shape index: {}]
  %s1 = inlined_call_operand.vmem [shape: f32[2,4,16,48], index: 1, kind: input, shape index: {}]
  %s2 = inlined_call_operand.vmem [shape: f32[2,4,16,32], index: 2, kind: input, shape index: {}]
  %s3 = inlined_call_operand.vmem [shape: f32[2,16,128], index: 3, kind: output, shape index: {0}]
  %s4 = inlined_call_operand.hbm [shape: f32[2,4,16,16], index: 4, kind: output, shape index: {1}]
  %5 = xla_tuple %s3, %s4
  %s6 = sld [smem:[#allocation0]]
  $region53: #{mla_forward.10} parent=0
    _
  %s8 = ssub.s32 1, %s6
  %s9 = scalar_select 0, %s8, %s6
  $region1: #{mla_forward.10} parent=0
    #allocation2 [shape = 'u8[65536]{0}', space=vmem, size = 0x10000, scoped, tag = 'output window, operand 1']
    #allocation3 [shape = 's32[2]{0}', space=sflag, size = 0x8, scoped, tag = 'scoped memory for mla_forward.10']
    %10 = vsyncpa [#allocation3], 0
    %s11 = scalar_lea.sflag [#allocation3], 1
    %12 = vsyncpa %s11, 0
    loop: start=0, step=1, limit=4
    $region2: #{mla_forward.10} parent=1 // loop_pre_header
      _
    $region3: #{mla_forward.10} parent=1 // loop_header
      %s14 = sphi 0, %s18
      %p15 = scmp.ge.s32.totalorder %s14, 4
      %s21 = sphi 0, %s33
      %s22 = sphi 0, %s29
      %s23 = sphi 0, %s21
      %s24 = sphi 0, %s22
      %s25 = sphi 0, %s23
      %s26 = sphi 0, %s24
      %s38 = sphi 0, %s40
      %s41 = sphi 0, %s38
      %s42 = sphi 0, %s41
      %s58 = sphi 0, %s42
      %s64 = sphi 0, %s66
      %s67 = sphi 0, %s64
      %s68 = sphi 0, %s67
      %s84 = sphi 0, %s68
      %s90 = sphi 0, %s92
      %s93 = sphi 0, %s90
      %s94 = sphi 0, %s93
      %s110 = sphi 0, %s94
      %s118 = sphi 0, %s120
      %s121 = sphi 0, %s118
      %s122 = sphi 0, %s121
      %s138 = sphi 0, %s122
      %s146 = sphi 0, %s148
      %s149 = sphi 0, %s146
      %s150 = sphi 0, %s149
      %s166 = sphi 0, %s150
    $region4: #{mla_forward.10} parent=1 // loop_header_branch
      %17 = sbr.rel (%p15) target = $region8
    $region5: #{mla_forward.10} parent=1 // loop_body
      %s19 = ssub.s32 %s14, 1
      %s20 = ssub.s32 %s14, 2
      %s27 = sadd.s32 1, %s22
      %p28 = scmp.ge.s32.totalorder %s27, 1
      %s29 = scalar_select %p28, 0, %s27
      %s30 = sadd.s32 1, %s21
      %s31 = scalar_select %p28, %s30, %s21
      %p32 = scmp.ge.s32.totalorder %s31, 2
      %s33 = scalar_select %p32, 0, %s31
      %s34 = ssub.s32 %s21, %s33
      %s35 = ssub.s32 %s22, %s29
      %s36 = sor.u32 %s34, %s35
      %p37 = scmp.eq.s32.totalorder %s36, 0
      %s39 = sadd.s32 %s38, 1
      %s40 = scalar_select %p37, %s38, %s39
      %p43 = pneg %p37
      %p44 = scmp.eq.s32.totalorder %s14, 1
      %p45 = por %p43, %p44
      %p46 = scmp.ne.s32.totalorder %s38, %s41
      %p47 = scmp.eq.s32.totalorder %s14, 0
      %p48 = por %p46, %p47
      %p49 = scmp.ne.s32.totalorder %s38, %s41
      %p50 = scmp.eq.s32.totalorder %s19, 1
      %p51 = por %p49, %p50
      %p52 = scmp.ne.s32.totalorder %s41, %s42
      %p53 = scmp.eq.s32.totalorder %s19, 0
      %p54 = por %p52, %p53
      %p55 = scmp.ne.s32.totalorder %s41, %s42
      %p56 = scmp.eq.s32.totalorder %s20, 1
      %p57 = por %p55, %p56
      %p59 = scmp.ne.s32.totalorder %s42, %s58
      %p60 = scmp.eq.s32.totalorder %s20, 0
      %p61 = por %p59, %p60
      %s62 = ssub.s32 %s21, %s33
      %p63 = scmp.eq.s32.totalorder %s62, 0
      %s65 = sadd.s32 %s64, 1
      %s66 = scalar_select %p63, %s64, %s65
      %p69 = pneg %p63
      %p70 = scmp.eq.s32.totalorder %s14, 1
      %p71 = por %p69, %p70
      %p72 = scmp.ne.s32.totalorder %s64, %s67
      %p73 = scmp.eq.s32.totalorder %s14, 0
      %p74 = por %p72, %p73
      %p75 = scmp.ne.s32.totalorder %s64, %s67
      %p76 = scmp.eq.s32.totalorder %s19, 1
      %p77 = por %p75, %p76
      %p78 = scmp.ne.s32.totalorder %s67, %s68
      %p79 = scmp.eq.s32.totalorder %s19, 0
      %p80 = por %p78, %p79
      %p81 = scmp.ne.s32.totalorder %s67, %s68
      %p82 = scmp.eq.s32.totalorder %s20, 1
      %p83 = por %p81, %p82
      %p85 = scmp.ne.s32.totalorder %s68, %s84
      %p86 = scmp.eq.s32.totalorder %s20, 0
      %p87 = por %p85, %p86
      %s88 = ssub.s32 %s21, %s33
      %p89 = scmp.eq.s32.totalorder %s88, 0
      %s91 = sadd.s32 %s90, 1
      %s92 = scalar_select %p89, %s90, %s91
      %p95 = pneg %p89
      %p96 = scmp.eq.s32.totalorder %s14, 1
      %p97 = por %p95, %p96
      %p98 = scmp.ne.s32.totalorder %s90, %s93
      %p99 = scmp.eq.s32.totalorder %s14, 0
      %p100 = por %p98, %p99
      %p101 = scmp.ne.s32.totalorder %s90, %s93
      %p102 = scmp.eq.s32.totalorder %s19, 1
      %p103 = por %p101, %p102
      %p104 = scmp.ne.s32.totalorder %s93, %s94
      %p105 = scmp.eq.s32.totalorder %s19, 0
      %p106 = por %p104, %p105
      %p107 = scmp.ne.s32.totalorder %s93, %s94
      %p108 = scmp.eq.s32.totalorder %s20, 1
      %p109 = por %p107, %p108
      %p111 = scmp.ne.s32.totalorder %s94, %s110
      %p112 = scmp.eq.s32.totalorder %s20, 0
      %p113 = por %p111, %p112
      %s114 = ssub.s32 %s21, %s33
      %s115 = ssub.s32 %s22, %s29
      %s116 = sor.u32 %s114, %s115
      %p117 = scmp.eq.s32.totalorder %s116, 0
      %s119 = sadd.s32 %s118, 1
      %s120 = scalar_select %p117, %s118, %s119
      %p123 = pneg %p117
      %p124 = scmp.eq.s32.totalorder %s14, 1
      %p125 = por %p123, %p124
      %p126 = scmp.ne.s32.totalorder %s118, %s121
      %p127 = scmp.eq.s32.totalorder %s14, 0
      %p128 = por %p126, %p127
      %p129 = scmp.ne.s32.totalorder %s118, %s121
      %p130 = scmp.eq.s32.totalorder %s19, 1
      %p131 = por %p129, %p130
      %p132 = scmp.ne.s32.totalorder %s121, %s122
      %p133 = scmp.eq.s32.totalorder %s19, 0
      %p134 = por %p132, %p133
      %p135 = scmp.ne.s32.totalorder %s121, %s122
      %p136 = scmp.eq.s32.totalorder %s20, 1
      %p137 = por %p135, %p136
      %p139 = scmp.ne.s32.totalorder %s122, %s138
      %p140 = scmp.eq.s32.totalorder %s20, 0
      %p141 = por %p139, %p140
      %s142 = ssub.s32 %s21, %s33
      %s143 = ssub.s32 %s22, %s29
      %s144 = sor.u32 %s142, %s143
      %p145 = scmp.eq.s32.totalorder %s144, 0
      %s147 = sadd.s32 %s146, 1
      %s148 = scalar_select %p145, %s146, %s147
      %p151 = pneg %p145
      %p152 = scmp.eq.s32.totalorder %s14, 1
      %p153 = por %p151, %p152
      %p154 = scmp.ne.s32.totalorder %s146, %s149
      %p155 = scmp.eq.s32.totalorder %s14, 0
      %p156 = por %p154, %p155
      %p157 = scmp.ne.s32.totalorder %s146, %s149
      %p158 = scmp.eq.s32.totalorder %s19, 1
      %p159 = por %p157, %p158
      %p160 = scmp.ne.s32.totalorder %s149, %s150
      %p161 = scmp.eq.s32.totalorder %s19, 0
      %p162 = por %p160, %p161
      %p163 = scmp.ne.s32.totalorder %s149, %s150
      %p164 = scmp.eq.s32.totalorder %s20, 1
      %p165 = por %p163, %p164
      %p167 = scmp.ne.s32.totalorder %s150, %s166
      %p168 = scmp.eq.s32.totalorder %s20, 0
      %p169 = por %p167, %p168
      %p170 = scmp.le.s32.totalorder 1, %s14
      %p171 = scmp.lt.s32.totalorder %s14, 3
      %p172 = pnand %p170, %p171
      %p173 = pneg %p172
      // Predicated region
      $region9: #{mla_forward.10} parent=5 // pred_check
        _
      $region10: #{mla_forward.10} parent=5 // pred_check_branch
        %175 = sbr.rel (%p172) target = $region12
      $region11: #{mla_forward.10} parent=5 // pred_region
        %s176 = ssub.s32 %s14, 1
      $region12: #{mla_forward.10} parent=5 // pred_fallthru
        _
      %p177 = scmp.lt.s32.totalorder %s14, 2
      // Predicated region
      $region13: #{mla_forward.10} parent=5 // pred_check
        %p178 = pneg %p177
      $region14: #{mla_forward.10} parent=5 // pred_check_branch
        %180 = sbr.rel (%p178) target = $region16
      $region15: #{mla_forward.10} parent=5 // pred_region
        // Predicated region
        $region17: #{mla_forward.10} parent=15 // pred_check
          %p181 = pneg %p48
        $region18: #{mla_forward.10} parent=15 // pred_check_branch
          %183 = sbr.rel (%p181) target = $region20
        $region19: #{mla_forward.10} parent=15 // pred_region
          %s184 = smul.u32 2, %s22
          %p185 = scmp.lt.s32.totalorder %s21, 1
          %s186 = scalar_select %p185, %s21, 1
          %p187 = scmp.lt.s32.totalorder %s184, 1
          %s188 = scalar_select %p187, %s184, 1
          %s189 = smul.addr %s186, 8
          %s190 = sadd.s32 %s188, %s189
          %s191 = smul.addr %s190, 8
          %s192 = scalar_lea.vmem %s0, %s191
          %s193 = smul.u32 2, %s22
        $region20: #{mla_forward.10} parent=15 // pred_fallthru
          _
        // Predicated region
        $region21: #{mla_forward.10} parent=15 // pred_check
          %p194 = pneg %p74
        $region22: #{mla_forward.10} parent=15 // pred_check_branch
          %196 = sbr.rel (%p194) target = $region24
        $region23: #{mla_forward.10} parent=15 // pred_region
          %p197 = scmp.lt.s32.totalorder %s21, 1
          %s198 = scalar_select %p197, %s21, 1
          %s199 = smul.addr %s198, 8
          %s200 = smul.addr %s199, 8
          %s201 = scalar_lea.vmem %s1, %s200
        $region24: #{mla_forward.10} parent=15 // pred_fallthru
          _
        // Predicated region
        $region25: #{mla_forward.10} parent=15 // pred_check
          %p202 = pneg %p100
        $region26: #{mla_forward.10} parent=15 // pred_check_branch
          %204 = sbr.rel (%p202) target = $region28
        $region27: #{mla_forward.10} parent=15 // pred_region
          %p205 = scmp.lt.s32.totalorder %s21, 1
          %s206 = scalar_select %p205, %s21, 1
          %s207 = smul.addr %s206, 8
          %s208 = smul.addr %s207, 8
          %s209 = scalar_lea.vmem %s2, %s208
        $region28: #{mla_forward.10} parent=15 // pred_fallthru
          _
      $region16: #{mla_forward.10} parent=5 // pred_fallthru
        _
      %p210 = scmp.le.s32.totalorder 1, %s14
      %p211 = scmp.lt.s32.totalorder %s14, 3
      %p212 = pnand %p210, %p211
      %p213 = pneg %p212
      // Predicated region
      $region29: #{mla_forward.10} parent=5 // pred_check
        _
      $region30: #{mla_forward.10} parent=5 // pred_check_branch
        %215 = sbr.rel (%p212) target = $region32
      $region31: #{mla_forward.10} parent=5 // pred_region
        %s216 = ssub.s32 %s14, 1
        %s217 = smul.u32 2, %s24
        %p218 = scmp.lt.s32.totalorder %s23, 1
        %s219 = scalar_select %p218, %s23, 1
        %p220 = scmp.lt.s32.totalorder %s217, 1
        %s221 = scalar_select %p220, %s217, 1
        %s222 = smul.addr %s219, 8
        %s223 = sadd.s32 %s221, %s222
        %s224 = smul.addr %s223, 8
        %s225 = scalar_lea.vmem %s0, %s224
        %p226 = pneg %p54
        %p227 = pneg %p51
        %p228 = scmp.lt.s32.totalorder %s23, 1
        %s229 = scalar_select %p228, %s23, 1
        %s230 = smul.addr %s229, 8
        %s231 = smul.addr %s230, 8
        %s232 = scalar_lea.vmem %s1, %s231
        %p233 = pneg %p80
        %p234 = pneg %p77
        %p235 = scmp.lt.s32.totalorder %s23, 1
        %s236 = scalar_select %p235, %s23, 1
        %s237 = smul.addr %s236, 8
        %s238 = smul.addr %s237, 8
        %s239 = scalar_lea.vmem %s2, %s238
        %p240 = pneg %p106
        %p241 = pneg %p103
        %p242 = pneg %p134
        %p243 = pneg %p131
        %s244 = smul.u32 2, %s24
        %p245 = scmp.lt.s32.totalorder %s23, 1
        %s246 = scalar_select %p245, %s23, 1
        %p247 = scmp.lt.s32.totalorder %s244, 1
        %s248 = scalar_select %p247, %s244, 1
        %s249 = smul.addr %s246, 2
        %s250 = sadd.s32 %s248, %s249
        %s251 = smul.addr %s250, 8
        %s252 = scalar_lea.vmem %s3, %s251
        %p253 = pneg %p162
        %p254 = pneg %p159
        %s255 = sand.u32 %s149, 1
        %s256 = scalar_lea.sflag [#allocation3], %s255
        %s257 = sand.u32 %s149, 1
        %s258 = smul.addr %s257, 64
        %s259 = scalar_lea.vmem [#allocation2], %s258
        %s260 = smul.u32 2, %s24
        %p261 = scmp.lt.s32.totalorder %s23, 1
        %s262 = scalar_select %p261, %s23, 1
        %p263 = scmp.lt.s32.totalorder %s260, 1
        %s264 = scalar_select %p263, %s260, 1
        %s265 = smul.addr %s262, 8
        %s266 = sadd.s32 %s264, %s265
        %s267 = smul.addr %s266, 8
        %s268 = scalar_lea.vmem %s0, %s267
        %s269 = smul.u32 2, %s24
        %p270 = scmp.lt.s32.totalorder %s23, 1
        %s271 = scalar_select %p270, %s23, 1
        %s272 = smul.addr %s271, 8
        %s273 = smul.addr %s272, 8
        %s274 = scalar_lea.vmem %s1, %s273
        %p275 = scmp.lt.s32.totalorder %s23, 1
        %s276 = scalar_select %p275, %s23, 1
        %s277 = smul.addr %s276, 8
        %s278 = smul.addr %s277, 8
        %s279 = scalar_lea.vmem %s2, %s278
        %s280 = smul.u32 2, %s24
        %p281 = scmp.lt.s32.totalorder %s23, 1
        %s282 = scalar_select %p281, %s23, 1
        %p283 = scmp.lt.s32.totalorder %s280, 1
        %s284 = scalar_select %p283, %s280, 1
        %s285 = smul.addr %s282, 2
        %s286 = sadd.s32 %s284, %s285
        %s287 = smul.addr %s286, 8
        %s288 = scalar_lea.vmem %s3, %s287
        %s289 = smul.u32 2, %s24
        %s290 = smul.u32 2, %s24
        %v292 = vld [vmem:[%s268] sm:$0xff]
        %v293 = vld [vmem:[%s268 + $0x8] sm:$0xff]
        %v294 = vld [vmem:[%s268 + $0x10] sm:$0xff]
        %v295 = vld [vmem:[%s268 + $0x18] sm:$0xff]
        %v296 = vld [vmem:[%s268 + $0x20] sm:$0xff]
        %v297 = vld [vmem:[%s268 + $0x28] sm:$0xff]
        %v298 = vld [vmem:[%s268 + $0x30] sm:$0xff]
        %v299 = vld [vmem:[%s268 + $0x38] sm:$0xff]
        %v300 = vld [vmem:[%s274] sm:$0xff]
        %v301 = vld [vmem:[%s274 + $0x8] sm:$0xff]
        %v302 = vld [vmem:[%s274 + $0x10] sm:$0xff]
        %v303 = vld [vmem:[%s274 + $0x18] sm:$0xff]
        %v304 = vld [vmem:[%s274 + $0x20] sm:$0xff]
        %v305 = vld [vmem:[%s274 + $0x28] sm:$0xff]
        %v306 = vld [vmem:[%s274 + $0x30] sm:$0xff]
        %v307 = vld [vmem:[%s274 + $0x38] sm:$0xff]
        %v308 = vpack.c.bf16 %v293, %v292
        %v309 = vpack.c.bf16 %v295, %v294
        %v310 = vpack.c.bf16 %v297, %v296
        %v311 = vpack.c.bf16 %v299, %v298
        %v312 = vpack.c.bf16 %v301, %v300
        %v313 = vpack.c.bf16 %v303, %v302
        %v314 = vpack.c.bf16 %v305, %v304
        %v315 = vpack.c.bf16 %v307, %v306
        %vm316 = vcmask 392192
        %v318 = vsel %vm316, %v308, 0
        %v321 = vsel %vm316, %v312, 0
        %323 = vmatprep.subr.bf16.mxu0 0
        %324 = vmatpush1.bf16.xpose.msra.mxu0 0
        %325 = vmatprep.subr.bf16.mxu0 0
        %326 = vmatpush1.bf16.xpose.msra.mxu0 0
        %327 = vmatprep.subr.bf16.mxu0 0
        %328 = vmatpush1.bf16.xpose.msra.mxu0 0
        %329 = vmatprep.subr.bf16.mxu0 0
        %330 = vmatpush1.bf16.xpose.msra.mxu0 0
        %331 = vmatprep.subr.bf16.mxu0 0
        %332 = vmatpush1.bf16.xpose.msra.mxu0 0
        %333 = vmatprep.subr.bf16.mxu0 0
        %334 = vmatpush1.bf16.xpose.msra.mxu0 0
        %335 = vmatprep.subr.bf16.mxu0 0
        %336 = vmatpush1.bf16.xpose.msra.mxu0 0
        %337 = vmatprep.subr.bf16.mxu0 0
        %338 = vmatpush1.bf16.xpose.msra.mxu0 %v321
        %339 = vmatprep.subr.bf16.mxu0 0
        %340 = vmatpush2.bf16.xpose.msra.mxu0 0
        %341 = vmatprep.subr.bf16.mxu0 0
        %342 = vmatpush2.bf16.xpose.msra.mxu0 0
        %343 = vmatprep.subr.bf16.mxu0 0
        %344 = vmatpush2.bf16.xpose.msra.mxu0 0
        %345 = vmatprep.subr.bf16.mxu0 0
        %346 = vmatpush2.bf16.xpose.msra.mxu0 0
        %347 = vmatprep.subr.bf16.mxu0 0
        %348 = vmatpush2.bf16.xpose.msra.mxu0 0
        %349 = vmatprep.subr.bf16.mxu0 0
        %350 = vmatpush2.bf16.xpose.msra.mxu0 0
        %351 = vmatprep.subr.bf16.mxu0 0
        %352 = vmatpush2.bf16.xpose.msra.mxu0 0
        %353 = vmatprep.subr.bf16.mxu0 0
        %354 = vmatpush2.bf16.xpose.msra.mxu0 0
        %355 = vmatprep.mubr.bf16.mxu0 0
        %356 = vmatmul.mubr.bf16.gmra.mxu0 %v318
        %v357 = vpop.f32.mrf.mxu0
        %v358 = vadd.f32 0.0, %v357
        %v359 = vpop.f32.mrf.mxu0
        %v360 = vpop.f32.mrf.mxu0
        %v361 = vadd.f32 0.0, %v360
        %v362 = vpop.f32.mrf.mxu0
        %363 = vdwg.mxu0
        %v365 = vsel %vm316, %v309, 0
        %v368 = vsel %vm316, %v313, 0
        %370 = vmatprep.subr.bf16.mxu0 0
        %371 = vmatpush1.bf16.xpose.msra.mxu0 0
        %372 = vmatprep.subr.bf16.mxu0 0
        %373 = vmatpush1.bf16.xpose.msra.mxu0 0
        %374 = vmatprep.subr.bf16.mxu0 0
        %375 = vmatpush1.bf16.xpose.msra.mxu0 0
        %376 = vmatprep.subr.bf16.mxu0 0
        %377 = vmatpush1.bf16.xpose.msra.mxu0 0
        %378 = vmatprep.subr.bf16.mxu0 0
        %379 = vmatpush1.bf16.xpose.msra.mxu0 0
        %380 = vmatprep.subr.bf16.mxu0 0
        %381 = vmatpush1.bf16.xpose.msra.mxu0 0
        %382 = vmatprep.subr.bf16.mxu0 0
        %383 = vmatpush1.bf16.xpose.msra.mxu0 0
        %384 = vmatprep.subr.bf16.mxu0 0
        %385 = vmatpush1.bf16.xpose.msra.mxu0 %v368
        %386 = vmatprep.subr.bf16.mxu0 0
        %387 = vmatpush2.bf16.xpose.msra.mxu0 0
        %388 = vmatprep.subr.bf16.mxu0 0
        %389 = vmatpush2.bf16.xpose.msra.mxu0 0
        %390 = vmatprep.subr.bf16.mxu0 0
        %391 = vmatpush2.bf16.xpose.msra.mxu0 0
        %392 = vmatprep.subr.bf16.mxu0 0
        %393 = vmatpush2.bf16.xpose.msra.mxu0 0
        %394 = vmatprep.subr.bf16.mxu0 0
        %395 = vmatpush2.bf16.xpose.msra.mxu0 0
        %396 = vmatprep.subr.bf16.mxu0 0
        %397 = vmatpush2.bf16.xpose.msra.mxu0 0
        %398 = vmatprep.subr.bf16.mxu0 0
        %399 = vmatpush2.bf16.xpose.msra.mxu0 0
        %400 = vmatprep.subr.bf16.mxu0 0
        %401 = vmatpush2.bf16.xpose.msra.mxu0 0
        %402 = vmatprep.mubr.bf16.mxu0 0
        %403 = vmatmul.mubr.bf16.gmra.mxu0 %v365
        %v404 = vpop.f32.mrf.mxu0
        %v405 = vadd.f32 0.0, %v404
        %v406 = vpop.f32.mrf.mxu0
        %v407 = vpop.f32.mrf.mxu0
        %v408 = vadd.f32 0.0, %v407
        %v409 = vpop.f32.mrf.mxu0
        %410 = vdwg.mxu0
        %v412 = vsel %vm316, %v310, 0
        %v415 = vsel %vm316, %v314, 0
        %417 = vmatprep.subr.bf16.mxu0 0
        %418 = vmatpush1.bf16.xpose.msra.mxu0 0
        %419 = vmatprep.subr.bf16.mxu0 0
        %420 = vmatpush1.bf16.xpose.msra.mxu0 0
        %421 = vmatprep.subr.bf16.mxu0 0
        %422 = vmatpush1.bf16.xpose.msra.mxu0 0
        %423 = vmatprep.subr.bf16.mxu0 0
        %424 = vmatpush1.bf16.xpose.msra.mxu0 0
        %425 = vmatprep.subr.bf16.mxu0 0
        %426 = vmatpush1.bf16.xpose.msra.mxu0 0
        %427 = vmatprep.subr.bf16.mxu0 0
        %428 = vmatpush1.bf16.xpose.msra.mxu0 0
        %429 = vmatprep.subr.bf16.mxu0 0
        %430 = vmatpush1.bf16.xpose.msra.mxu0 0
        %431 = vmatprep.subr.bf16.mxu0 0
        %432 = vmatpush1.bf16.xpose.msra.mxu0 %v415
        %433 = vmatprep.subr.bf16.mxu0 0
        %434 = vmatpush2.bf16.xpose.msra.mxu0 0
        %435 = vmatprep.subr.bf16.mxu0 0
        %436 = vmatpush2.bf16.xpose.msra.mxu0 0
        %437 = vmatprep.subr.bf16.mxu0 0
        %438 = vmatpush2.bf16.xpose.msra.mxu0 0
        %439 = vmatprep.subr.bf16.mxu0 0
        %440 = vmatpush2.bf16.xpose.msra.mxu0 0
        %441 = vmatprep.subr.bf16.mxu0 0
        %442 = vmatpush2.bf16.xpose.msra.mxu0 0
        %443 = vmatprep.subr.bf16.mxu0 0
        %444 = vmatpush2.bf16.xpose.msra.mxu0 0
        %445 = vmatprep.subr.bf16.mxu0 0
        %446 = vmatpush2.bf16.xpose.msra.mxu0 0
        %447 = vmatprep.subr.bf16.mxu0 0
        %448 = vmatpush2.bf16.xpose.msra.mxu0 0
        %449 = vmatprep.mubr.bf16.mxu0 0
        %450 = vmatmul.mubr.bf16.gmra.mxu0 %v412
        %v451 = vpop.f32.mrf.mxu0
        %v452 = vadd.f32 0.0, %v451
        %v453 = vpop.f32.mrf.mxu0
        %v454 = vpop.f32.mrf.mxu0
        %v455 = vadd.f32 0.0, %v454
        %v456 = vpop.f32.mrf.mxu0
        %457 = vdwg.mxu0
        %v459 = vsel %vm316, %v311, 0
        %v462 = vsel %vm316, %v315, 0
        %464 = vmatprep.subr.bf16.mxu0 0
        %465 = vmatpush1.bf16.xpose.msra.mxu0 0
        %466 = vmatprep.subr.bf16.mxu0 0
        %467 = vmatpush1.bf16.xpose.msra.mxu0 0
        %468 = vmatprep.subr.bf16.mxu0 0
        %469 = vmatpush1.bf16.xpose.msra.mxu0 0
        %470 = vmatprep.subr.bf16.mxu0 0
        %471 = vmatpush1.bf16.xpose.msra.mxu0 0
        %472 = vmatprep.subr.bf16.mxu0 0
        %473 = vmatpush1.bf16.xpose.msra.mxu0 0
        %474 = vmatprep.subr.bf16.mxu0 0
        %475 = vmatpush1.bf16.xpose.msra.mxu0 0
        %476 = vmatprep.subr.bf16.mxu0 0
        %477 = vmatpush1.bf16.xpose.msra.mxu0 0
        %478 = vmatprep.subr.bf16.mxu0 0
        %479 = vmatpush1.bf16.xpose.msra.mxu0 %v462
        %480 = vmatprep.subr.bf16.mxu0 0
        %481 = vmatpush2.bf16.xpose.msra.mxu0 0
        %482 = vmatprep.subr.bf16.mxu0 0
        %483 = vmatpush2.bf16.xpose.msra.mxu0 0
        %484 = vmatprep.subr.bf16.mxu0 0
        %485 = vmatpush2.bf16.xpose.msra.mxu0 0
        %486 = vmatprep.subr.bf16.mxu0 0
        %487 = vmatpush2.bf16.xpose.msra.mxu0 0
        %488 = vmatprep.subr.bf16.mxu0 0
        %489 = vmatpush2.bf16.xpose.msra.mxu0 0
        %490 = vmatprep.subr.bf16.mxu0 0
        %491 = vmatpush2.bf16.xpose.msra.mxu0 0
        %492 = vmatprep.subr.bf16.mxu0 0
        %493 = vmatpush2.bf16.xpose.msra.mxu0 0
        %494 = vmatprep.subr.bf16.mxu0 0
        %495 = vmatpush2.bf16.xpose.msra.mxu0 0
        %496 = vmatprep.mubr.bf16.mxu0 0
        %497 = vmatmul.mubr.bf16.gmra.mxu0 %v459
        %v498 = vpop.f32.mrf.mxu0
        %v499 = vadd.f32 0.0, %v498
        %v500 = vpop.f32.mrf.mxu0
        %v501 = vpop.f32.mrf.mxu0
        %v502 = vadd.f32 0.0, %v501
        %v503 = vpop.f32.mrf.mxu0
        %504 = vdwg.mxu0
        %v505 = vmul.f32 %v358, 0.14433756
        %v506 = vmul.f32 %v361, 0.14433756
        %v507 = vmul.f32 %v405, 0.14433756
        %v508 = vmul.f32 %v408, 0.14433756
        %v509 = vmul.f32 %v452, 0.14433756
        %v510 = vmul.f32 %v455, 0.14433756
        %v511 = vmul.f32 %v499, 0.14433756
        %v512 = vmul.f32 %v502, 0.14433756
        %vm513 = vcmask 130048
        %v514 = vsel %vm513, %v505, -inf
        %515 = vmax.xlane.f32.xlu0 %v514
        %v516 = vpop.xlane.xlu0 %515
        %v517 = vsel %vm513, %v506, -inf
        %518 = vmax.xlane.f32.xlu0 %v517
        %v519 = vpop.xlane.xlu0 %518
        %v520 = vsel %vm513, %v507, -inf
        %521 = vmax.xlane.f32.xlu0 %v520
        %v522 = vpop.xlane.xlu0 %521
        %v523 = vsel %vm513, %v508, -inf
        %524 = vmax.xlane.f32.xlu0 %v523
        %v525 = vpop.xlane.xlu0 %524
        %v526 = vsel %vm513, %v509, -inf
        %527 = vmax.xlane.f32.xlu0 %v526
        %v528 = vpop.xlane.xlu0 %527
        %v529 = vsel %vm513, %v510, -inf
        %530 = vmax.xlane.f32.xlu0 %v529
        %v531 = vpop.xlane.xlu0 %530
        %v532 = vsel %vm513, %v511, -inf
        %533 = vmax.xlane.f32.xlu0 %v532
        %v534 = vpop.xlane.xlu0 %533
        %v535 = vsel %vm513, %v512, -inf
        %536 = vmax.xlane.f32.xlu0 %v535
        %v537 = vpop.xlane.xlu0 %536
        %vm538 = vcmp.eq.f32.partialorder %v516, -inf
        %vm539 = vcmp.eq.f32.partialorder %v519, -inf
        %vm540 = vcmp.eq.f32.partialorder %v522, -inf
        %vm541 = vcmp.eq.f32.partialorder %v525, -inf
        %vm542 = vcmp.eq.f32.partialorder %v528, -inf
        %vm543 = vcmp.eq.f32.partialorder %v531, -inf
        %vm544 = vcmp.eq.f32.partialorder %v534, -inf
        %vm545 = vcmp.eq.f32.partialorder %v537, -inf
        %v546 = vsel %vm538, 0.0, %v516
        %v547 = vsel %vm539, 0.0, %v519
        %v548 = vsel %vm540, 0.0, %v522
        %v549 = vsel %vm541, 0.0, %v525
        %v550 = vsel %vm542, 0.0, %v528
        %v551 = vsel %vm543, 0.0, %v531
        %v552 = vsel %vm544, 0.0, %v534
        %v553 = vsel %vm545, 0.0, %v537
        %v554 = vsub.f32 %v505, %v546
        %v555 = vsub.f32 %v506, %v547
        %v556 = vsub.f32 %v507, %v548
        %v557 = vsub.f32 %v508, %v549
        %v558 = vsub.f32 %v509, %v550
        %v559 = vsub.f32 %v510, %v551
        %v560 = vsub.f32 %v511, %v552
        %v561 = vsub.f32 %v512, %v553
        %v562 = vmul.f32 %v554, 1.442695
        %v563 = vpow.pop %v562
        %v564 = vmul.f32 %v555, 1.442695
        %v565 = vpow.pop %v564
        %v566 = vmul.f32 %v556, 1.442695
        %v567 = vpow.pop %v566
        %v568 = vmul.f32 %v557, 1.442695
        %v569 = vpow.pop %v568
        %v570 = vmul.f32 %v558, 1.442695
        %v571 = vpow.pop %v570
        %v572 = vmul.f32 %v559, 1.442695
        %v573 = vpow.pop %v572
        %v574 = vmul.f32 %v560, 1.442695
        %v575 = vpow.pop %v574
        %v576 = vmul.f32 %v561, 1.442695
        %v577 = vpow.pop %v576
        %v578 = vsel %vm513, %v563, 0.0
        %579 = vadd.xlane.f32.xlu0 %v578
        %v580 = vpop.xlane.xlu0 %579
        %v581 = vsel %vm513, %v565, 0.0
        %582 = vadd.xlane.f32.xlu0 %v581
        %v583 = vpop.xlane.xlu0 %582
        %v584 = vsel %vm513, %v567, 0.0
        %585 = vadd.xlane.f32.xlu0 %v584
        %v586 = vpop.xlane.xlu0 %585
        %v587 = vsel %vm513, %v569, 0.0
        %588 = vadd.xlane.f32.xlu0 %v587
        %v589 = vpop.xlane.xlu0 %588
        %v590 = vsel %vm513, %v571, 0.0
        %591 = vadd.xlane.f32.xlu0 %v590
        %v592 = vpop.xlane.xlu0 %591
        %v593 = vsel %vm513, %v573, 0.0
        %594 = vadd.xlane.f32.xlu0 %v593
        %v595 = vpop.xlane.xlu0 %594
        %v596 = vsel %vm513, %v575, 0.0
        %597 = vadd.xlane.f32.xlu0 %v596
        %v598 = vpop.xlane.xlu0 %597
        %v599 = vsel %vm513, %v577, 0.0
        %600 = vadd.xlane.f32.xlu0 %v599
        %v601 = vpop.xlane.xlu0 %600
        %vm602 = vcmp.eq.f32.partialorder %v580, 0.0
        %vm603 = vcmp.eq.f32.partialorder %v583, 0.0
        %vm604 = vcmp.eq.f32.partialorder %v586, 0.0
        %vm605 = vcmp.eq.f32.partialorder %v589, 0.0
        %vm606 = vcmp.eq.f32.partialorder %v592, 0.0
        %vm607 = vcmp.eq.f32.partialorder %v595, 0.0
        %vm608 = vcmp.eq.f32.partialorder %v598, 0.0
        %vm609 = vcmp.eq.f32.partialorder %v601, 0.0
        %v610 = vsel %vm602, 1.0, %v580
        %v611 = vsel %vm603, 1.0, %v583
        %v612 = vsel %vm604, 1.0, %v586
        %v613 = vsel %vm605, 1.0, %v589
        %v614 = vsel %vm606, 1.0, %v592
        %v615 = vsel %vm607, 1.0, %v595
        %v616 = vsel %vm608, 1.0, %v598
        %v617 = vsel %vm609, 1.0, %v601
        %v618 = vrcp.pop %v610
        %v619 = vrcp.pop %v611
        %v620 = vrcp.pop %v612
        %v621 = vrcp.pop %v613
        %v622 = vrcp.pop %v614
        %v623 = vrcp.pop %v615
        %v624 = vrcp.pop %v616
        %v625 = vrcp.pop %v617
        %v626 = vmul.f32 %v563, %v618
        %v627 = vmul.f32 %v565, %v619
        %v628 = vmul.f32 %v567, %v620
        %v629 = vmul.f32 %v569, %v621
        %v630 = vmul.f32 %v571, %v622
        %v631 = vmul.f32 %v573, %v623
        %v632 = vmul.f32 %v575, %v624
        %v633 = vmul.f32 %v577, %v625
        %634 = vst.msk [vmem:[%s259] sm:$0xff] %vm513, %v626
        %635 = vst.msk [vmem:[%s259 + $0x8] sm:$0xff] %vm513, %v627
        %636 = vst.msk [vmem:[%s259 + $0x10] sm:$0xff] %vm513, %v628
        %637 = vst.msk [vmem:[%s259 + $0x18] sm:$0xff] %vm513, %v629
        %638 = vst.msk [vmem:[%s259 + $0x20] sm:$0xff] %vm513, %v630
        %639 = vst.msk [vmem:[%s259 + $0x28] sm:$0xff] %vm513, %v631
        %640 = vst.msk [vmem:[%s259 + $0x30] sm:$0xff] %vm513, %v632
        %641 = vst.msk [vmem:[%s259 + $0x38] sm:$0xff] %vm513, %v633
        %v642 = vpack.c.bf16 %v627, %v626
        %v643 = vpack.c.bf16 %v629, %v628
        %v644 = vpack.c.bf16 %v631, %v630
        %v645 = vpack.c.bf16 %v633, %v632
        %v646 = vld [vmem:[%s279] sm:$0xff]
        %v647 = vld [vmem:[%s279 + $0x8] sm:$0xff]
        %v648 = vld [vmem:[%s279 + $0x10] sm:$0xff]
        %v649 = vld [vmem:[%s279 + $0x18] sm:$0xff]
        %v650 = vld [vmem:[%s279 + $0x20] sm:$0xff]
        %v651 = vld [vmem:[%s279 + $0x28] sm:$0xff]
        %v652 = vld [vmem:[%s279 + $0x30] sm:$0xff]
        %v653 = vld [vmem:[%s279 + $0x38] sm:$0xff]
        %v654 = vpack.c.bf16 %v647, %v646
        %v655 = vpack.c.bf16 %v649, %v648
        %v656 = vpack.c.bf16 %v651, %v650
        %v657 = vpack.c.bf16 %v653, %v652
        %v659 = vsel %vm513, %v642, 0
        %661 = vmatprep.subr.bf16.mxu0 0
        %662 = vmatpush1.bf16.msra.mxu0 0
        %663 = vmatprep.subr.bf16.mxu0 0
        %664 = vmatpush1.bf16.msra.mxu0 0
        %665 = vmatprep.subr.bf16.mxu0 0
        %666 = vmatpush1.bf16.msra.mxu0 0
        %667 = vmatprep.subr.bf16.mxu0 0
        %668 = vmatpush1.bf16.msra.mxu0 0
        %669 = vmatprep.subr.bf16.mxu0 0
        %670 = vmatpush1.bf16.msra.mxu0 0
        %671 = vmatprep.subr.bf16.mxu0 0
        %672 = vmatpush1.bf16.msra.mxu0 0
        %673 = vmatprep.subr.bf16.mxu0 0
        %674 = vmatpush1.bf16.msra.mxu0 0
        %675 = vmatprep.subr.bf16.mxu0 0
        %676 = vmatpush1.bf16.msra.mxu0 %v654
        %677 = vmatprep.subr.bf16.mxu0 0
        %678 = vmatpush2.bf16.msra.mxu0 0
        %679 = vmatprep.subr.bf16.mxu0 0
        %680 = vmatpush2.bf16.msra.mxu0 0
        %681 = vmatprep.subr.bf16.mxu0 0
        %682 = vmatpush2.bf16.msra.mxu0 0
        %683 = vmatprep.subr.bf16.mxu0 0
        %684 = vmatpush2.bf16.msra.mxu0 0
        %685 = vmatprep.subr.bf16.mxu0 0
        %686 = vmatpush2.bf16.msra.mxu0 0
        %687 = vmatprep.subr.bf16.mxu0 0
        %688 = vmatpush2.bf16.msra.mxu0 0
        %689 = vmatprep.subr.bf16.mxu0 0
        %690 = vmatpush2.bf16.msra.mxu0 0
        %691 = vmatprep.subr.bf16.mxu0 0
        %692 = vmatpush2.bf16.msra.mxu0 0
        %693 = vmatprep.mubr.bf16.mxu0 0
        %694 = vmatmul.mubr.bf16.gmra.mxu0 %v659
        %v695 = vpop.f32.mrf.mxu0
        %v696 = vadd.f32 0.0, %v695
        %v697 = vpop.f32.mrf.mxu0
        %v698 = vpop.f32.mrf.mxu0
        %v699 = vadd.f32 0.0, %v698
        %v700 = vpop.f32.mrf.mxu0
        %701 = vdwg.mxu0
        %v703 = vsel %vm513, %v643, 0
        %705 = vmatprep.subr.bf16.mxu0 0
        %706 = vmatpush1.bf16.msra.mxu0 0
        %707 = vmatprep.subr.bf16.mxu0 0
        %708 = vmatpush1.bf16.msra.mxu0 0
        %709 = vmatprep.subr.bf16.mxu0 0
        %710 = vmatpush1.bf16.msra.mxu0 0
        %711 = vmatprep.subr.bf16.mxu0 0
        %712 = vmatpush1.bf16.msra.mxu0 0
        %713 = vmatprep.subr.bf16.mxu0 0
        %714 = vmatpush1.bf16.msra.mxu0 0
        %715 = vmatprep.subr.bf16.mxu0 0
        %716 = vmatpush1.bf16.msra.mxu0 0
        %717 = vmatprep.subr.bf16.mxu0 0
        %718 = vmatpush1.bf16.msra.mxu0 0
        %719 = vmatprep.subr.bf16.mxu0 0
        %720 = vmatpush1.bf16.msra.mxu0 %v655
        %721 = vmatprep.subr.bf16.mxu0 0
        %722 = vmatpush2.bf16.msra.mxu0 0
        %723 = vmatprep.subr.bf16.mxu0 0
        %724 = vmatpush2.bf16.msra.mxu0 0
        %725 = vmatprep.subr.bf16.mxu0 0
        %726 = vmatpush2.bf16.msra.mxu0 0
        %727 = vmatprep.subr.bf16.mxu0 0
        %728 = vmatpush2.bf16.msra.mxu0 0
        %729 = vmatprep.subr.bf16.mxu0 0
        %730 = vmatpush2.bf16.msra.mxu0 0
        %731 = vmatprep.subr.bf16.mxu0 0
        %732 = vmatpush2.bf16.msra.mxu0 0
        %733 = vmatprep.subr.bf16.mxu0 0
        %734 = vmatpush2.bf16.msra.mxu0 0
        %735 = vmatprep.subr.bf16.mxu0 0
        %736 = vmatpush2.bf16.msra.mxu0 0
        %737 = vmatprep.mubr.bf16.mxu0 0
        %738 = vmatmul.mubr.bf16.gmra.mxu0 %v703
        %v739 = vpop.f32.mrf.mxu0
        %v740 = vadd.f32 0.0, %v739
        %v741 = vpop.f32.mrf.mxu0
        %v742 = vpop.f32.mrf.mxu0
        %v743 = vadd.f32 0.0, %v742
        %v744 = vpop.f32.mrf.mxu0
        %745 = vdwg.mxu0
        %v747 = vsel %vm513, %v644, 0
        %749 = vmatprep.subr.bf16.mxu0 0
        %750 = vmatpush1.bf16.msra.mxu0 0
        %751 = vmatprep.subr.bf16.mxu0 0
        %752 = vmatpush1.bf16.msra.mxu0 0
        %753 = vmatprep.subr.bf16.mxu0 0
        %754 = vmatpush1.bf16.msra.mxu0 0
        %755 = vmatprep.subr.bf16.mxu0 0
        %756 = vmatpush1.bf16.msra.mxu0 0
        %757 = vmatprep.subr.bf16.mxu0 0
        %758 = vmatpush1.bf16.msra.mxu0 0
        %759 = vmatprep.subr.bf16.mxu0 0
        %760 = vmatpush1.bf16.msra.mxu0 0
        %761 = vmatprep.subr.bf16.mxu0 0
        %762 = vmatpush1.bf16.msra.mxu0 0
        %763 = vmatprep.subr.bf16.mxu0 0
        %764 = vmatpush1.bf16.msra.mxu0 %v656
        %765 = vmatprep.subr.bf16.mxu0 0
        %766 = vmatpush2.bf16.msra.mxu0 0
        %767 = vmatprep.subr.bf16.mxu0 0
        %768 = vmatpush2.bf16.msra.mxu0 0
        %769 = vmatprep.subr.bf16.mxu0 0
        %770 = vmatpush2.bf16.msra.mxu0 0
        %771 = vmatprep.subr.bf16.mxu0 0
        %772 = vmatpush2.bf16.msra.mxu0 0
        %773 = vmatprep.subr.bf16.mxu0 0
        %774 = vmatpush2.bf16.msra.mxu0 0
        %775 = vmatprep.subr.bf16.mxu0 0
        %776 = vmatpush2.bf16.msra.mxu0 0
        %777 = vmatprep.subr.bf16.mxu0 0
        %778 = vmatpush2.bf16.msra.mxu0 0
        %779 = vmatprep.subr.bf16.mxu0 0
        %780 = vmatpush2.bf16.msra.mxu0 0
        %781 = vmatprep.mubr.bf16.mxu0 0
        %782 = vmatmul.mubr.bf16.gmra.mxu0 %v747
        %v783 = vpop.f32.mrf.mxu0
        %v784 = vadd.f32 0.0, %v783
        %v785 = vpop.f32.mrf.mxu0
        %v786 = vpop.f32.mrf.mxu0
        %v787 = vadd.f32 0.0, %v786
        %v788 = vpop.f32.mrf.mxu0
        %789 = vdwg.mxu0
        %v791 = vsel %vm513, %v645, 0
        %793 = vmatprep.subr.bf16.mxu0 0
        %794 = vmatpush1.bf16.msra.mxu0 0
        %795 = vmatprep.subr.bf16.mxu0 0
        %796 = vmatpush1.bf16.msra.mxu0 0
        %797 = vmatprep.subr.bf16.mxu0 0
        %798 = vmatpush1.bf16.msra.mxu0 0
        %799 = vmatprep.subr.bf16.mxu0 0
        %800 = vmatpush1.bf16.msra.mxu0 0
        %801 = vmatprep.subr.bf16.mxu0 0
        %802 = vmatpush1.bf16.msra.mxu0 0
        %803 = vmatprep.subr.bf16.mxu0 0
        %804 = vmatpush1.bf16.msra.mxu0 0
        %805 = vmatprep.subr.bf16.mxu0 0
        %806 = vmatpush1.bf16.msra.mxu0 0
        %807 = vmatprep.subr.bf16.mxu0 0
        %808 = vmatpush1.bf16.msra.mxu0 %v657
        %809 = vmatprep.subr.bf16.mxu0 0
        %810 = vmatpush2.bf16.msra.mxu0 0
        %811 = vmatprep.subr.bf16.mxu0 0
        %812 = vmatpush2.bf16.msra.mxu0 0
        %813 = vmatprep.subr.bf16.mxu0 0
        %814 = vmatpush2.bf16.msra.mxu0 0
        %815 = vmatprep.subr.bf16.mxu0 0
        %816 = vmatpush2.bf16.msra.mxu0 0
        %817 = vmatprep.subr.bf16.mxu0 0
        %818 = vmatpush2.bf16.msra.mxu0 0
        %819 = vmatprep.subr.bf16.mxu0 0
        %820 = vmatpush2.bf16.msra.mxu0 0
        %821 = vmatprep.subr.bf16.mxu0 0
        %822 = vmatpush2.bf16.msra.mxu0 0
        %823 = vmatprep.subr.bf16.mxu0 0
        %824 = vmatpush2.bf16.msra.mxu0 0
        %825 = vmatprep.mubr.bf16.mxu0 0
        %826 = vmatmul.mubr.bf16.gmra.mxu0 %v791
        %v827 = vpop.f32.mrf.mxu0
        %v828 = vadd.f32 0.0, %v827
        %v829 = vpop.f32.mrf.mxu0
        %v830 = vpop.f32.mrf.mxu0
        %v831 = vadd.f32 0.0, %v830
        %v832 = vpop.f32.mrf.mxu0
        %833 = vdwg.mxu0
        %836 = vrot.lane.b32.xlu0 %v740, 32
        %v837 = vpop.permute.xlu0 %836
        %838 = vrot.lane.b32.xlu0 %v743, 32
        %v839 = vpop.permute.xlu0 %838
        %844 = vrot.lane.b32.xlu0 %v784, 64
        %v845 = vpop.permute.xlu0 %844
        %846 = vrot.lane.b32.xlu0 %v787, 64
        %v847 = vpop.permute.xlu0 %846
        %852 = vrot.lane.b32.xlu0 %v828, 96
        %v853 = vpop.permute.xlu0 %852
        %854 = vrot.lane.b32.xlu0 %v831, 96
        %v855 = vpop.permute.xlu0 %854
        %vm858 = vcmask 261120
        %v859 = vsel %vm858, %v696, %v837
        %v860 = vsel %vm858, %v699, %v839
        %vm861 = vcmask 523264
        %v862 = vsel %vm861, %v859, %v845
        %v863 = vsel %vm861, %v860, %v847
        %vm864 = vcmask 785408
        %v865 = vsel %vm864, %v862, %v853
        %v866 = vsel %vm864, %v863, %v855
        %867 = vst [vmem:[%s288] sm:$0xff] %v865
        %868 = vst [vmem:[%s288 + $0x8] sm:$0xff] %v866
        %s869 = smul.u32 2, %s24
        %p870 = scmp.lt.s32.totalorder %s23, 1
        %s871 = scalar_select %p870, %s23, 1
        %p872 = scmp.lt.s32.totalorder %s869, 1
        %s873 = scalar_select %p872, %s869, 1
        %s874 = smul.addr %s871, 2
        %s875 = sadd.s32 %s873, %s874
        %s876 = smul.addr %s875, 8
        %s877 = scalar_lea.vmem %s3, %s876
        %s878 = sand.u32 %s149, 1
        %s879 = scalar_lea.sflag [#allocation3], %s878
        %s880 = sand.u32 %s149, 1
        %s881 = smul.addr %s880, 64
        %s882 = scalar_lea.vmem [#allocation2], %s881
        // Predicated region
        $region33: #{mla_forward.10} parent=31 // pred_check
          %p883 = pneg %p131
        $region34: #{mla_forward.10} parent=31 // pred_check_branch
          %885 = sbr.rel (%p883) target = $region36
        $region35: #{mla_forward.10} parent=31 // pred_region
          %s886 = smul.u32 2, %s24
        $region36: #{mla_forward.10} parent=31 // pred_fallthru
          _
        // Predicated region
        $region37: #{mla_forward.10} parent=31 // pred_check
          %p887 = pneg %p159
        $region38: #{mla_forward.10} parent=31 // pred_check_branch
          %889 = sbr.rel (%p887) target = $region40
        $region39: #{mla_forward.10} parent=31 // pred_region
          %s890 = smul.u32 2, %s24
          %s892 = ssub.s32 1024, 1024
          %893 = vsyncadd %s879, %s892
          %s894 = smul.addr %s23, 8
          %s895 = sadd.s32 %s890, %s894
          %s896 = smul.addr %s895, 128
          %s897 = scalar_lea.hbm %s4, %s896
          %s898 = sshll.u32 %s882, 4
          %s899 = int_to_ptr.vmem [resolvable:$true] %s898
          %904 = dma.vmem_to_hbm [thread:$0]  %s899, 1024, %s897, %s879, 128, 128, 8
        $region40: #{mla_forward.10} parent=31 // pred_fallthru
          _
      $region32: #{mla_forward.10} parent=5 // pred_fallthru
        _
      %p905 = scmp.le.s32.totalorder 2, %s14
      // Predicated region
      $region41: #{mla_forward.10} parent=5 // pred_check
        %p906 = pneg %p905
      $region42: #{mla_forward.10} parent=5 // pred_check_branch
        %908 = sbr.rel (%p906) target = $region44
      $region43: #{mla_forward.10} parent=5 // pred_region
        %s909 = ssub.s32 %s14, 2
        // Predicated region
        $region45: #{mla_forward.10} parent=43 // pred_check
          %p910 = pneg %p137
        $region46: #{mla_forward.10} parent=43 // pred_check_branch
          %912 = sbr.rel (%p910) target = $region48
        $region47: #{mla_forward.10} parent=43 // pred_region
          %s913 = smul.u32 2, %s26
          %p914 = scmp.lt.s32.totalorder %s25, 1
          %s915 = scalar_select %p914, %s25, 1
          %p916 = scmp.lt.s32.totalorder %s913, 1
          %s917 = scalar_select %p916, %s913, 1
          %s918 = smul.addr %s915, 2
          %s919 = sadd.s32 %s917, %s918
          %s920 = smul.addr %s919, 8
          %s921 = scalar_lea.vmem %s3, %s920
        $region48: #{mla_forward.10} parent=43 // pred_fallthru
          _
        // Predicated region
        $region49: #{mla_forward.10} parent=43 // pred_check
          %p922 = pneg %p165
        $region50: #{mla_forward.10} parent=43 // pred_check_branch
          %924 = sbr.rel (%p922) target = $region52
        $region51: #{mla_forward.10} parent=43 // pred_region
          %s925 = sand.u32 %s150, 1
          %s926 = scalar_lea.sflag [#allocation3], %s925
          %s927 = sand.u32 %s150, 1
          %s928 = smul.addr %s927, 64
          %s929 = scalar_lea.vmem [#allocation2], %s928
          %930 = dma.done %s926, 1024
        $region52: #{mla_forward.10} parent=43 // pred_fallthru
          _
      $region44: #{mla_forward.10} parent=5 // pred_fallthru
        _
    $region6: #{mla_forward.10} parent=1 // loop_footer
      %s18 = sadd.s32 1, %s14
    $region7: #{mla_forward.10} parent=1 // loop_footer_branch
      %13 = sbr.rel target = $region3
    $region8: #{mla_forward.10} parent=1 // loop_exit
      _
    %931 = vsyncpa [#allocation3], 1
    %s932 = scalar_lea.sflag [#allocation3], 1
    %933 = vsyncpa %s932, 1

</llo_original>
